<compile_context>
chip_gen: v5e
topology: v5e:2x2
jax: 0.10.0
libtpu: 0.0.40
codegen_flags: <defaults>
</compile_context>

<pallas_src>
import functools

import jax
import jax.numpy as jnp
from jax import lax
from jax.experimental import pallas as pl
from jax.experimental.pallas import tpu as pltpu

_NEG = float(jnp.finfo(jnp.float32).min)  # used only inside max(); never in arithmetic


def _merging_pool_kernel(x_ref, w_ref, b_ref, g_ref, bt_ref, o_ref, *, H, W, H2):
    """One grid step processes B batch elements.

    x_ref  : (B, Hp, Wp, C)  zero-padded NHWC tile (Hp = 2*H2+2, Wp = W+4)
    w_ref  : (C, Co)         projection weight, bf16 (already transposed)
    b_ref, g_ref, bt_ref : (1, Co) f32  proj bias, LayerNorm gamma, LayerNorm beta
    o_ref  : (B*L, Co)       output rows for these B images, L = H2*W
    """
    B, _, Wp, C = x_ref.shape
    L = H2 * W

    x = x_ref[...].astype(jnp.float32)                       # (B, Hp, Wp, C)

    # ---- max-pool operand: padded W columns must not win the max ------------------
    # native 2D iota on the (sublane, lane) = (Wp, C) tile, broadcast over (B, Hp).
    col = lax.broadcasted_iota(jnp.int32, (Wp, C), 0)
    col_pad = (col < 2) | (col >= W + 2)
    xm = jnp.where(col_pad, _NEG, x)                          # (B, Hp, Wp, C)

    # ---- H direction: 3-tap window, kernel 3 / stride 2 / pad 1, all rows at once --
    # padded rows 2h, 2h+1, 2h+2 for h in [0, H2): group pairs via a leading-dim reshape.
    g0s = x[:, 0:2 * H2].reshape(B, H2, 2, Wp, C)
    g2s = x[:, 2:2 * H2 + 2].reshape(B, H2, 2, Wp, C)
    hsum = g0s[:, :, 0] + g0s[:, :, 1] + g2s[:, :, 0]         # (B, H2, Wp, C); pad rows are 0

    g0m = xm[:, 0:2 * H2].reshape(B, H2, 2, Wp, C)
    g2m = xm[:, 2:2 * H2 + 2].reshape(B, H2, 2, Wp, C)
    t0, t1, t2 = g0m[:, :, 0], g0m[:, :, 1], g2m[:, :, 0]     # taps: rows 2h, 2h+1, 2h+2
    hmax_all = jnp.maximum(jnp.maximum(t0, t1), t2)
    # border variants: t1 is always a valid row; t0 hits the top pad row only at h==0,
    # t2 hits the bottom pad row only at h==H2-1 when H is odd.
    hmax_top = t1 if H == 1 else jnp.maximum(t1, t2)
    odd_h = (H % 2 == 1) and H > 1
    hmax_bot = jnp.maximum(t0, t1) if odd_h else None

    # ---- W direction: 5-tap window, kernel 5 / stride 1 / pad 2, whole slab ---------
    def _wsum5(a):
        r = a[:, :, 0:W]
        for k in range(1, 5):
            r = r + a[:, :, k:k + W]
        return r

    def _wmax5(a):
        r = a[:, :, 0:W]
        for k in range(1, 5):
            r = jnp.maximum(r, a[:, :, k:k + W])
        return r

    s = _wsum5(hsum)                                          # (B, H2, W, C)
    m_all = _wmax5(hmax_all)
    m_top = _wmax5(hmax_top)
    m_bot = _wmax5(hmax_bot) if odd_h else None

    # ---- flatten (H2, W) -> L and fix the border output rows with a native iota ----
    s = s.reshape(B, L, C)
    m_all = m_all.reshape(B, L, C)
    m_top = m_top.reshape(B, L, C)
    rid = lax.broadcasted_iota(jnp.int32, (L, C), 0)          # row id within one image
    m = jnp.where(rid < W, m_top, m_all)                      # h == 0 rows
    if odd_h:
        m = jnp.where(rid >= L - W, m_bot.reshape(B, L, C), m)  # h == H2-1 rows

    # (avg + max) * 0.5 ; avg divisor is 3*5 = 15 (count_include_pad=True)
    pooled = (s * (1.0 / 15.0) + m) * 0.5                     # (B, L, C)

    # ---- projection (Linear) on the MXU: bf16 operands, f32 accumulation ------------
    feats = pooled.reshape(B * L, C).astype(jnp.bfloat16)
    y = jnp.dot(feats, w_ref[...], preferred_element_type=jnp.float32) + b_ref[...]

    # ---- LayerNorm over the channel dim (eps=1e-5, biased variance) -----------------
    mu = jnp.mean(y, axis=-1, keepdims=True)
    var = jnp.mean((y - mu) ** 2, axis=-1, keepdims=True)
    yn = (y - mu) * lax.rsqrt(var + 1e-5)
    o_ref[...] = (yn * g_ref[...] + bt_ref[...]).astype(o_ref.dtype)


def _pick_batch_block(n):
    """Largest divisor of n that is <= 8 while keeping >= 2 grid steps when n >= 2."""
    target = max(1, min(8, n // 2))
    for b in range(target, 0, -1):
        if n % b == 0:
            return b
    return 1


@jax.jit
def merging_block_forward(x_nchw, proj_w, proj_b, ln_g, ln_b):
    """x_nchw: (N, C, H, W). Returns (N, H2*W, C_out) float32."""
    N, C, H, W = x_nchw.shape
    Co = proj_w.shape[0]
    H2 = (H - 1) // 2 + 1
    L = H2 * W
    Hp = 2 * H2 + 2                       # 1 top pad + H rows + 1-2 bottom pad rows
    Wp = W + 4
    pad_bot = Hp - 1 - H

    # NCHW -> NHWC (channels on the lane dim) + single zero spatial pad.
    x = jnp.transpose(x_nchw, (0, 2, 3, 1))                    # (N, H, W, C), keeps dtype
    xz = jnp.pad(x, ((0, 0), (1, pad_bot), (2, 2), (0, 0)))    # (N, Hp, Wp, C)

    wt = proj_w.T.astype(jnp.bfloat16)                         # (C, Co) bf16 MXU operand
    b2 = proj_b.reshape(1, Co).astype(jnp.float32)
    g2 = ln_g.reshape(1, Co).astype(jnp.float32)
    bt2 = ln_b.reshape(1, Co).astype(jnp.float32)

    B = _pick_batch_block(N)
    if (B * L) % 8 != 0:                                       # keep the output block legal
        B = N
    grid = (N // B,)

    kernel = functools.partial(_merging_pool_kernel, H=H, W=W, H2=H2)

    # VMEM budget for this block plan (double-buffered I/O + constants + working slabs).
    itemsize = xz.dtype.itemsize
    est = (2 * B * Hp * Wp * C * itemsize      # input, double buffered
           + 2 * B * L * Co * 4                # output, double buffered
           + 2 * (C * Co * 2 + 3 * Co * 4)     # weight / bias / gamma / beta
           + 8 * B * L * C * 4)                # pooling slabs / spill headroom
    vmem_limit = int(min(112 * 2 ** 20, max(32 * 2 ** 20, 2 * est)))

    out = pl.pallas_call(
        kernel,
        out_shape=jax.ShapeDtypeStruct((N * L, Co), jnp.float32),
        grid_spec=pltpu.PrefetchScalarGridSpec(
            num_scalar_prefetch=0,
            grid=grid,
            in_specs=[
                pl.BlockSpec((B, Hp, Wp, C), lambda n: (n, 0, 0, 0)),
                pl.BlockSpec((C, Co), lambda n: (0, 0)),
                pl.BlockSpec((1, Co), lambda n: (0, 0)),
                pl.BlockSpec((1, Co), lambda n: (0, 0)),
                pl.BlockSpec((1, Co), lambda n: (0, 0)),
            ],
            out_specs=pl.BlockSpec((B * L, Co), lambda n: (n, 0)),
        ),
        compiler_params=pltpu.CompilerParams(
            dimension_semantics=("parallel",),
            vmem_limit_bytes=vmem_limit,
        ),
    )(xz, wt, b2, g2, bt2)

    return out.reshape(N, L, Co)


def _reference_forward(x, w, b, g, bt, bf16_matmul=False):
    """Pure-JAX reference matching the PyTorch forward (Pool path)."""
    N, C, H, W = x.shape
    pad = ((0, 0), (0, 0), (1, 1), (2, 2))
    dims = (1, 1, 3, 5)
    strides = (1, 1, 2, 1)
    avg = lax.reduce_window(x, 0.0, lax.add, dims, strides, pad) / 15.0
    mx = lax.reduce_window(x, -jnp.inf, lax.max, dims, strides, pad)
    pooled = (avg + mx) * 0.5                                   # (N, C, H2, W)
    H2 = pooled.shape[2]
    flat = pooled.reshape(N, C, H2 * W).transpose(0, 2, 1)      # (N, L, C)
    if bf16_matmul:                                             # emulate bf16 MXU operands
        flat = flat.astype(jnp.bfloat16).astype(jnp.float32)
        w = w.astype(jnp.bfloat16).astype(jnp.float32)
    y = jnp.einsum('nlc,oc->nlo', flat, w, precision=lax.Precision.HIGHEST) + b
    mu = y.mean(-1, keepdims=True)
    var = ((y - mu) ** 2).mean(-1, keepdims=True)
    return (y - mu) / jnp.sqrt(var + 1e-5) * g + bt


if __name__ == "__main__":
    import numpy as np

    key = jax.random.PRNGKey(0)
    k1, k2, k3, k4, k5 = jax.random.split(key, 5)

    N, C, H, W = 2, 4, 16, 16
    Co = 2 * C                                                  # out_channels = 2*in_channels

    x = jax.random.normal(k1, (N, C, H, W), jnp.float32)
    proj_w = 0.1 * jax.random.normal(k2, (Co, C), jnp.float32)  # nn.Linear weight (out, in)
    proj_b = 0.1 * jax.random.normal(k3, (Co,), jnp.float32)
    ln_g = 1.0 + 0.1 * jax.random.normal(k4, (Co,), jnp.float32)
    ln_b = 0.1 * jax.random.normal(k5, (Co,), jnp.float32)

    out = merging_block_forward(x, proj_w, proj_b, ln_g, ln_b)
    out = jax.block_until_ready(out)
    out = np.asarray(out)

    # Tight structural check vs. a reference that uses the same bf16 matmul operands.
    ref_bf16 = np.asarray(_reference_forward(x, proj_w, proj_b, ln_g, ln_b, bf16_matmul=True))
    np.testing.assert_allclose(out, ref_bf16, rtol=2e-3, atol=2e-3)

    # Looser check vs. exact f32 math; slack accounts only for bf16 MXU operand rounding.
    ref_f32 = np.asarray(_reference_forward(x, proj_w, proj_b, ln_g, ln_b, bf16_matmul=False))
    np.testing.assert_allclose(out, ref_f32, rtol=5e-2, atol=5e-2)

    print("KERNEL_OK")
</pallas_src>

<mosaic_0001>
module attributes {stable_mosaic.version = 11 : i64} {
  func.func @_merging_pool_kernel(%arg0: i32, %arg1: memref<1x18x20x4xf32, #tpu.memory_space<vmem>>, %arg2: memref<4x8xbf16, #tpu.memory_space<vmem>>, %arg3: memref<1x8xf32, #tpu.memory_space<vmem>>, %arg4: memref<1x8xf32, #tpu.memory_space<vmem>>, %arg5: memref<1x8xf32, #tpu.memory_space<vmem>>, %arg6: memref<128x8xf32, #tpu.memory_space<vmem>>) attributes {dimension_semantics = [#tpu.dimension_semantics<parallel>], iteration_bounds = array<i64: 2>, scalar_prefetch = 0 : i64, scratch_operands = 0 : i64, tpu.core_type = #tpu.core_type<tc>, window_params = [{transform_indices = @transform_0, window_bounds = array<i64: 1, 18, 20, 4>}, {pipeline_mode = #tpu.pipeline_mode<synchronous>, transform_indices = @transform_1, window_bounds = array<i64: 4, 8>}, {pipeline_mode = #tpu.pipeline_mode<synchronous>, transform_indices = @transform_2, window_bounds = array<i64: 1, 8>}, {pipeline_mode = #tpu.pipeline_mode<synchronous>, transform_indices = @transform_3, window_bounds = array<i64: 1, 8>}, {pipeline_mode = #tpu.pipeline_mode<synchronous>, transform_indices = @transform_4, window_bounds = array<i64: 1, 8>}, {transform_indices = @transform_5, window_bounds = array<i64: 128, 8>}]} {
    %c0 = arith.constant 0 : index
    %c0_0 = arith.constant 0 : index
    %c0_1 = arith.constant 0 : index
    %c0_2 = arith.constant 0 : index
    %0 = vector.load %arg1[%c0, %c0_0, %c0_1, %c0_2] : memref<1x18x20x4xf32, #tpu.memory_space<vmem>>, vector<1x18x20x4xf32>
    %1 = tpu.iota {dimensions = array<i32: 0>} : vector<20x4xi32>
    %c2_i32 = arith.constant 2 : i32
    %2 = vector.broadcast %c2_i32 : i32 to vector<20x4xi32>
    %3 = arith.cmpi slt, %1, %2 : vector<20x4xi32>
    %c18_i32 = arith.constant 18 : i32
    %4 = vector.broadcast %c18_i32 : i32 to vector<20x4xi32>
    %5 = arith.cmpi sge, %1, %4 : vector<20x4xi32>
    %6 = arith.ori %3, %5 : vector<20x4xi1>
    %cst = arith.constant -3.40282347E+38 : f32
    %7 = vector.shape_cast %6 : vector<20x4xi1> to vector<1x1x20x4xi1>
    %8 = vector.broadcast %7 : vector<1x1x20x4xi1> to vector<1x18x20x4xi1>
    %9 = vector.broadcast %cst : f32 to vector<1x18x20x4xf32>
    %10 = arith.select %8, %9, %0 : vector<1x18x20x4xi1>, vector<1x18x20x4xf32>
    %11 = vector.extract_strided_slice %0 {offsets = [0, 0, 0, 0], sizes = [1, 16, 20, 4], strides = [1, 1, 1, 1]} : vector<1x18x20x4xf32> to vector<1x16x20x4xf32>
    %12 = vector.shape_cast %11 : vector<1x16x20x4xf32> to vector<1x8x2x20x4xf32>
    %13 = vector.extract_strided_slice %0 {offsets = [0, 2, 0, 0], sizes = [1, 16, 20, 4], strides = [1, 1, 1, 1]} : vector<1x18x20x4xf32> to vector<1x16x20x4xf32>
    %14 = vector.shape_cast %13 : vector<1x16x20x4xf32> to vector<1x8x2x20x4xf32>
    %15 = vector.extract_strided_slice %12 {offsets = [0, 0, 0, 0, 0], sizes = [1, 8, 1, 20, 4], strides = [1, 1, 1, 1, 1]} : vector<1x8x2x20x4xf32> to vector<1x8x1x20x4xf32>
    %16 = vector.shape_cast %15 : vector<1x8x1x20x4xf32> to vector<1x8x20x4xf32>
    %17 = vector.extract_strided_slice %12 {offsets = [0, 0, 1, 0, 0], sizes = [1, 8, 1, 20, 4], strides = [1, 1, 1, 1, 1]} : vector<1x8x2x20x4xf32> to vector<1x8x1x20x4xf32>
    %18 = vector.shape_cast %17 : vector<1x8x1x20x4xf32> to vector<1x8x20x4xf32>
    %19 = arith.addf %16, %18 : vector<1x8x20x4xf32>
    %20 = vector.extract_strided_slice %14 {offsets = [0, 0, 0, 0, 0], sizes = [1, 8, 1, 20, 4], strides = [1, 1, 1, 1, 1]} : vector<1x8x2x20x4xf32> to vector<1x8x1x20x4xf32>
    %21 = vector.shape_cast %20 : vector<1x8x1x20x4xf32> to vector<1x8x20x4xf32>
    %22 = arith.addf %19, %21 : vector<1x8x20x4xf32>
    %23 = vector.extract_strided_slice %10 {offsets = [0, 0, 0, 0], sizes = [1, 16, 20, 4], strides = [1, 1, 1, 1]} : vector<1x18x20x4xf32> to vector<1x16x20x4xf32>
    %24 = vector.shape_cast %23 : vector<1x16x20x4xf32> to vector<1x8x2x20x4xf32>
    %25 = vector.extract_strided_slice %10 {offsets = [0, 2, 0, 0], sizes = [1, 16, 20, 4], strides = [1, 1, 1, 1]} : vector<1x18x20x4xf32> to vector<1x16x20x4xf32>
    %26 = vector.shape_cast %25 : vector<1x16x20x4xf32> to vector<1x8x2x20x4xf32>
    %27 = vector.extract_strided_slice %24 {offsets = [0, 0, 0, 0, 0], sizes = [1, 8, 1, 20, 4], strides = [1, 1, 1, 1, 1]} : vector<1x8x2x20x4xf32> to vector<1x8x1x20x4xf32>
    %28 = vector.shape_cast %27 : vector<1x8x1x20x4xf32> to vector<1x8x20x4xf32>
    %29 = vector.extract_strided_slice %24 {offsets = [0, 0, 1, 0, 0], sizes = [1, 8, 1, 20, 4], strides = [1, 1, 1, 1, 1]} : vector<1x8x2x20x4xf32> to vector<1x8x1x20x4xf32>
    %30 = vector.shape_cast %29 : vector<1x8x1x20x4xf32> to vector<1x8x20x4xf32>
    %31 = vector.extract_strided_slice %26 {offsets = [0, 0, 0, 0, 0], sizes = [1, 8, 1, 20, 4], strides = [1, 1, 1, 1, 1]} : vector<1x8x2x20x4xf32> to vector<1x8x1x20x4xf32>
    %32 = vector.shape_cast %31 : vector<1x8x1x20x4xf32> to vector<1x8x20x4xf32>
    %33 = arith.maximumf %28, %30 : vector<1x8x20x4xf32>
    %34 = arith.maximumf %33, %32 : vector<1x8x20x4xf32>
    %35 = arith.maximumf %30, %32 : vector<1x8x20x4xf32>
    %36 = vector.extract_strided_slice %22 {offsets = [0, 0, 0, 0], sizes = [1, 8, 16, 4], strides = [1, 1, 1, 1]} : vector<1x8x20x4xf32> to vector<1x8x16x4xf32>
    %37 = vector.extract_strided_slice %22 {offsets = [0, 0, 1, 0], sizes = [1, 8, 16, 4], strides = [1, 1, 1, 1]} : vector<1x8x20x4xf32> to vector<1x8x16x4xf32>
    %38 = arith.addf %36, %37 : vector<1x8x16x4xf32>
    %39 = vector.extract_strided_slice %22 {offsets = [0, 0, 2, 0], sizes = [1, 8, 16, 4], strides = [1, 1, 1, 1]} : vector<1x8x20x4xf32> to vector<1x8x16x4xf32>
    %40 = arith.addf %38, %39 : vector<1x8x16x4xf32>
    %41 = vector.extract_strided_slice %22 {offsets = [0, 0, 3, 0], sizes = [1, 8, 16, 4], strides = [1, 1, 1, 1]} : vector<1x8x20x4xf32> to vector<1x8x16x4xf32>
    %42 = arith.addf %40, %41 : vector<1x8x16x4xf32>
    %43 = vector.extract_strided_slice %22 {offsets = [0, 0, 4, 0], sizes = [1, 8, 16, 4], strides = [1, 1, 1, 1]} : vector<1x8x20x4xf32> to vector<1x8x16x4xf32>
    %44 = arith.addf %42, %43 : vector<1x8x16x4xf32>
    %45 = vector.extract_strided_slice %34 {offsets = [0, 0, 0, 0], sizes = [1, 8, 16, 4], strides = [1, 1, 1, 1]} : vector<1x8x20x4xf32> to vector<1x8x16x4xf32>
    %46 = vector.extract_strided_slice %34 {offsets = [0, 0, 1, 0], sizes = [1, 8, 16, 4], strides = [1, 1, 1, 1]} : vector<1x8x20x4xf32> to vector<1x8x16x4xf32>
    %47 = arith.maximumf %45, %46 : vector<1x8x16x4xf32>
    %48 = vector.extract_strided_slice %34 {offsets = [0, 0, 2, 0], sizes = [1, 8, 16, 4], strides = [1, 1, 1, 1]} : vector<1x8x20x4xf32> to vector<1x8x16x4xf32>
    %49 = arith.maximumf %47, %48 : vector<1x8x16x4xf32>
    %50 = vector.extract_strided_slice %34 {offsets = [0, 0, 3, 0], sizes = [1, 8, 16, 4], strides = [1, 1, 1, 1]} : vector<1x8x20x4xf32> to vector<1x8x16x4xf32>
    %51 = arith.maximumf %49, %50 : vector<1x8x16x4xf32>
    %52 = vector.extract_strided_slice %34 {offsets = [0, 0, 4, 0], sizes = [1, 8, 16, 4], strides = [1, 1, 1, 1]} : vector<1x8x20x4xf32> to vector<1x8x16x4xf32>
    %53 = arith.maximumf %51, %52 : vector<1x8x16x4xf32>
    %54 = vector.extract_strided_slice %35 {offsets = [0, 0, 0, 0], sizes = [1, 8, 16, 4], strides = [1, 1, 1, 1]} : vector<1x8x20x4xf32> to vector<1x8x16x4xf32>
    %55 = vector.extract_strided_slice %35 {offsets = [0, 0, 1, 0], sizes = [1, 8, 16, 4], strides = [1, 1, 1, 1]} : vector<1x8x20x4xf32> to vector<1x8x16x4xf32>
    %56 = arith.maximumf %54, %55 : vector<1x8x16x4xf32>
    %57 = vector.extract_strided_slice %35 {offsets = [0, 0, 2, 0], sizes = [1, 8, 16, 4], strides = [1, 1, 1, 1]} : vector<1x8x20x4xf32> to vector<1x8x16x4xf32>
    %58 = arith.maximumf %56, %57 : vector<1x8x16x4xf32>
    %59 = vector.extract_strided_slice %35 {offsets = [0, 0, 3, 0], sizes = [1, 8, 16, 4], strides = [1, 1, 1, 1]} : vector<1x8x20x4xf32> to vector<1x8x16x4xf32>
    %60 = arith.maximumf %58, %59 : vector<1x8x16x4xf32>
    %61 = vector.extract_strided_slice %35 {offsets = [0, 0, 4, 0], sizes = [1, 8, 16, 4], strides = [1, 1, 1, 1]} : vector<1x8x20x4xf32> to vector<1x8x16x4xf32>
    %62 = arith.maximumf %60, %61 : vector<1x8x16x4xf32>
    %63 = vector.shape_cast %44 : vector<1x8x16x4xf32> to vector<1x128x4xf32>
    %64 = vector.shape_cast %53 : vector<1x8x16x4xf32> to vector<1x128x4xf32>
    %65 = vector.shape_cast %62 : vector<1x8x16x4xf32> to vector<1x128x4xf32>
    %66 = tpu.iota {dimensions = array<i32: 0>} : vector<128x4xi32>
    %c16_i32 = arith.constant 16 : i32
    %67 = vector.broadcast %c16_i32 : i32 to vector<128x4xi32>
    %68 = arith.cmpi slt, %66, %67 : vector<128x4xi32>
    %69 = vector.shape_cast %68 : vector<128x4xi1> to vector<1x128x4xi1>
    %70 = arith.select %69, %65, %64 : vector<1x128x4xi1>, vector<1x128x4xf32>
    %cst_3 = arith.constant 0.0666666701 : f32
    %71 = vector.broadcast %cst_3 : f32 to vector<1x128x4xf32>
    %72 = arith.mulf %63, %71 : vector<1x128x4xf32>
    %73 = arith.addf %72, %70 : vector<1x128x4xf32>
    %cst_4 = arith.constant 5.000000e-01 : f32
    %74 = vector.broadcast %cst_4 : f32 to vector<1x128x4xf32>
    %75 = arith.mulf %73, %74 : vector<1x128x4xf32>
    %76 = vector.shape_cast %75 : vector<1x128x4xf32> to vector<128x4xf32>
    %77 = arith.truncf %76 : vector<128x4xf32> to vector<128x4xbf16>
    %c0_5 = arith.constant 0 : index
    %c0_6 = arith.constant 0 : index
    %78 = vector.load %arg2[%c0_5, %c0_6] : memref<4x8xbf16, #tpu.memory_space<vmem>>, vector<4x8xbf16>
    %cst_7 = arith.constant dense<0.000000e+00> : vector<128x8xf32>
    %79 = tpu.matmul %77, %78, %cst_7 {dimension_numbers = #tpu.dot_dimension_numbers<[1], [0], [0], [1], [0, 0, 1, 1], [], []>} : vector<128x4xbf16>, vector<4x8xbf16>, vector<128x8xf32> -> vector<128x8xf32>
    %c0_8 = arith.constant 0 : index
    %c0_9 = arith.constant 0 : index
    %80 = vector.load %arg3[%c0_8, %c0_9] : memref<1x8xf32, #tpu.memory_space<vmem>>, vector<1x8xf32>
    %81 = vector.broadcast %80 : vector<1x8xf32> to vector<128x8xf32>
    %82 = arith.addf %79, %81 : vector<128x8xf32>
    %cst_10 = arith.constant dense<0.000000e+00> : vector<128xf32>
    %83 = vector.multi_reduction <add>, %82, %cst_10 [1] : vector<128x8xf32> to vector<128xf32>
    %84 = vector.shape_cast %83 : vector<128xf32> to vector<128x1xf32>
    %cst_11 = arith.constant 8.000000e+00 : f32
    %85 = vector.broadcast %cst_11 : f32 to vector<128x1xf32>
    %86 = arith.divf %84, %85 : vector<128x1xf32>
    %87 = vector.broadcast %86 : vector<128x1xf32> to vector<128x8xf32>
    %88 = arith.subf %82, %87 : vector<128x8xf32>
    %89 = arith.mulf %88, %88 : vector<128x8xf32>
    %cst_12 = arith.constant dense<0.000000e+00> : vector<128xf32>
    %90 = vector.multi_reduction <add>, %89, %cst_12 [1] : vector<128x8xf32> to vector<128xf32>
    %91 = vector.shape_cast %90 : vector<128xf32> to vector<128x1xf32>
    %cst_13 = arith.constant 8.000000e+00 : f32
    %92 = vector.broadcast %cst_13 : f32 to vector<128x1xf32>
    %93 = arith.divf %91, %92 : vector<128x1xf32>
    %94 = vector.broadcast %86 : vector<128x1xf32> to vector<128x8xf32>
    %95 = arith.subf %82, %94 : vector<128x8xf32>
    %cst_14 = arith.constant 9.99999974E-6 : f32
    %96 = vector.broadcast %cst_14 : f32 to vector<128x1xf32>
    %97 = arith.addf %93, %96 : vector<128x1xf32>
    %98 = math.rsqrt %97 : vector<128x1xf32>
    %99 = vector.broadcast %98 : vector<128x1xf32> to vector<128x8xf32>
    %100 = arith.mulf %95, %99 : vector<128x8xf32>
    %c0_15 = arith.constant 0 : index
    %c0_16 = arith.constant 0 : index
    %101 = vector.load %arg4[%c0_15, %c0_16] : memref<1x8xf32, #tpu.memory_space<vmem>>, vector<1x8xf32>
    %102 = vector.broadcast %101 : vector<1x8xf32> to vector<128x8xf32>
    %103 = arith.mulf %100, %102 : vector<128x8xf32>
    %c0_17 = arith.constant 0 : index
    %c0_18 = arith.constant 0 : index
    %104 = vector.load %arg5[%c0_17, %c0_18] : memref<1x8xf32, #tpu.memory_space<vmem>>, vector<1x8xf32>
    %105 = vector.broadcast %104 : vector<1x8xf32> to vector<128x8xf32>
    %106 = arith.addf %103, %105 : vector<128x8xf32>
    %c0_19 = arith.constant 0 : index
    %c0_20 = arith.constant 0 : index
    %107 = vector.load %arg6[%c0_19, %c0_20] : memref<128x8xf32, #tpu.memory_space<vmem>>, vector<128x8xf32>
    tpu.vector_store %arg6[%c0_19, %c0_20], %106 {strides = array<i32>} : memref<128x8xf32, #tpu.memory_space<vmem>>, vector<128x8xf32>,
    return
  }
  func.func @transform_0(%arg0: i32) -> (i32, i32, i32, i32) {
    %c0_i32 = arith.constant 0 : i32
    %c0_i32_0 = arith.constant 0 : i32
    %c0_i32_1 = arith.constant 0 : i32
    %c0_i32_2 = arith.constant 0 : i32
    return %arg0, %c0_i32, %c0_i32_0, %c0_i32_1 : i32, i32, i32, i32
  }
  func.func @transform_1(%arg0: i32) -> (i32, i32) {
    %c0_i32 = arith.constant 0 : i32
    %c0_i32_0 = arith.constant 0 : i32
    %c0_i32_1 = arith.constant 0 : i32
    return %c0_i32, %c0_i32_0 : i32, i32
  }
  func.func @transform_2(%arg0: i32) -> (i32, i32) {
    %c0_i32 = arith.constant 0 : i32
    %c0_i32_0 = arith.constant 0 : i32
    %c0_i32_1 = arith.constant 0 : i32
    return %c0_i32, %c0_i32_0 : i32, i32
  }
  func.func @transform_3(%arg0: i32) -> (i32, i32) {
    %c0_i32 = arith.constant 0 : i32
    %c0_i32_0 = arith.constant 0 : i32
    %c0_i32_1 = arith.constant 0 : i32
    return %c0_i32, %c0_i32_0 : i32, i32
  }
  func.func @transform_4(%arg0: i32) -> (i32, i32) {
    %c0_i32 = arith.constant 0 : i32
    %c0_i32_0 = arith.constant 0 : i32
    %c0_i32_1 = arith.constant 0 : i32
    return %c0_i32, %c0_i32_0 : i32, i32
  }
  func.func @transform_5(%arg0: i32) -> (i32, i32) {
    %c0_i32 = arith.constant 0 : i32
    %c0_i32_0 = arith.constant 0 : i32
    return %arg0, %c0_i32 : i32, i32
  }
}

</mosaic_0001>

<llo_original>
// kernel: merging_block_forward.1
$region0: #{merging_block_forward.1}
  #allocation0 [shape = 'u32[]', space=smem, size = 0x4, offset = 0x4, fixed_abs, tag = 'smem constant byte address 0x4 - core index']
  #allocation1 [shape = 'u32[72,128]{1,0:T(1,128)}', space=vmem, size = 0x9000, scoped, tag = 'internal scratch']
  %s0 = inlined_call_operand.vmem [shape: f32[2,18,20,4], index: 0, kind: input, shape index: {}]
  %s1 = inlined_call_operand.vmem [shape: bf16[4,8], index: 1, kind: input, shape index: {}]
  %s2 = inlined_call_operand.vmem [shape: f32[1,8], index: 2, kind: input, shape index: {}]
  %s3 = inlined_call_operand.vmem [shape: f32[1,8], index: 3, kind: input, shape index: {}]
  %s4 = inlined_call_operand.vmem [shape: f32[1,8], index: 4, kind: input, shape index: {}]
  %s5 = inlined_call_operand.vmem [shape: f32[256,8], index: 5, kind: output, shape index: {}]
  %s6 = sld [smem:[#allocation0]]
  $region53: #{merging_block_forward.1} parent=0
    _
  %s8 = ssub.s32 1, %s6
  %s9 = scalar_select 0, %s8, %s6
  loop: start=0, step=1, limit=4
  $region2: #{merging_block_forward.1} parent=0 // loop_pre_header
    _
  $region3: #{merging_block_forward.1} parent=0 // loop_header
    %s11 = sphi 0, %s15
    %p12 = scmp.ge.s32.totalorder %s11, 4
    %s21 = sphi 0, %s23
    %s24 = sphi 0, %s21
    %s25 = sphi 0, %s24
    %s41 = sphi 0, %s25
    %s45 = sphi 0, %s45
    %s47 = sphi 0, %s45
    %s48 = sphi 0, %s47
    %s62 = sphi 0, %s48
    %s66 = sphi 0, %s66
    %s68 = sphi 0, %s66
    %s69 = sphi 0, %s68
    %s83 = sphi 0, %s69
    %s87 = sphi 0, %s87
    %s89 = sphi 0, %s87
    %s90 = sphi 0, %s89
    %s104 = sphi 0, %s90
    %s108 = sphi 0, %s108
    %s110 = sphi 0, %s108
    %s111 = sphi 0, %s110
    %s125 = sphi 0, %s111
    %s131 = sphi 0, %s133
    %s134 = sphi 0, %s131
    %s135 = sphi 0, %s134
    %s151 = sphi 0, %s135
  $region4: #{merging_block_forward.1} parent=0 // loop_header_branch
    %14 = sbr.rel (%p12) target = $region8
  $region5: #{merging_block_forward.1} parent=0 // loop_body
    %s16 = ssub.s32 %s11, 1
    %s17 = ssub.s32 %s11, 2
    %s18 = sadd.s32 %s11, 1
    %s19 = ssub.s32 %s11, %s18
    %p20 = scmp.eq.s32.totalorder %s19, 0
    %s22 = sadd.s32 %s21, 1
    %s23 = scalar_select %p20, %s21, %s22
    %p26 = pneg %p20
    %p27 = scmp.eq.s32.totalorder %s11, 1
    %p28 = por %p26, %p27
    %p29 = scmp.ne.s32.totalorder %s21, %s24
    %p30 = scmp.eq.s32.totalorder %s11, 0
    %p31 = por %p29, %p30
    %p32 = scmp.ne.s32.totalorder %s21, %s24
    %p33 = scmp.eq.s32.totalorder %s16, 1
    %p34 = por %p32, %p33
    %p35 = scmp.ne.s32.totalorder %s24, %s25
    %p36 = scmp.eq.s32.totalorder %s16, 0
    %p37 = por %p35, %p36
    %p38 = scmp.ne.s32.totalorder %s24, %s25
    %p39 = scmp.eq.s32.totalorder %s17, 1
    %p40 = por %p38, %p39
    %p42 = scmp.ne.s32.totalorder %s25, %s41
    %p43 = scmp.eq.s32.totalorder %s17, 0
    %p44 = por %p42, %p43
    %s46 = sadd.s32 %s45, 1
    %p49 = scmp.eq.s32.totalorder %s11, 1
    %p50 = scmp.ne.s32.totalorder %s45, %s47
    %p51 = scmp.eq.s32.totalorder %s11, 0
    %p52 = por %p50, %p51
    %p53 = scmp.ne.s32.totalorder %s45, %s47
    %p54 = scmp.eq.s32.totalorder %s16, 1
    %p55 = por %p53, %p54
    %p56 = scmp.ne.s32.totalorder %s47, %s48
    %p57 = scmp.eq.s32.totalorder %s16, 0
    %p58 = por %p56, %p57
    %p59 = scmp.ne.s32.totalorder %s47, %s48
    %p60 = scmp.eq.s32.totalorder %s17, 1
    %p61 = por %p59, %p60
    %p63 = scmp.ne.s32.totalorder %s48, %s62
    %p64 = scmp.eq.s32.totalorder %s17, 0
    %p65 = por %p63, %p64
    %s67 = sadd.s32 %s66, 1
    %p70 = scmp.eq.s32.totalorder %s11, 1
    %p71 = scmp.ne.s32.totalorder %s66, %s68
    %p72 = scmp.eq.s32.totalorder %s11, 0
    %p73 = por %p71, %p72
    %p74 = scmp.ne.s32.totalorder %s66, %s68
    %p75 = scmp.eq.s32.totalorder %s16, 1
    %p76 = por %p74, %p75
    %p77 = scmp.ne.s32.totalorder %s68, %s69
    %p78 = scmp.eq.s32.totalorder %s16, 0
    %p79 = por %p77, %p78
    %p80 = scmp.ne.s32.totalorder %s68, %s69
    %p81 = scmp.eq.s32.totalorder %s17, 1
    %p82 = por %p80, %p81
    %p84 = scmp.ne.s32.totalorder %s69, %s83
    %p85 = scmp.eq.s32.totalorder %s17, 0
    %p86 = por %p84, %p85
    %s88 = sadd.s32 %s87, 1
    %p91 = scmp.eq.s32.totalorder %s11, 1
    %p92 = scmp.ne.s32.totalorder %s87, %s89
    %p93 = scmp.eq.s32.totalorder %s11, 0
    %p94 = por %p92, %p93
    %p95 = scmp.ne.s32.totalorder %s87, %s89
    %p96 = scmp.eq.s32.totalorder %s16, 1
    %p97 = por %p95, %p96
    %p98 = scmp.ne.s32.totalorder %s89, %s90
    %p99 = scmp.eq.s32.totalorder %s16, 0
    %p100 = por %p98, %p99
    %p101 = scmp.ne.s32.totalorder %s89, %s90
    %p102 = scmp.eq.s32.totalorder %s17, 1
    %p103 = por %p101, %p102
    %p105 = scmp.ne.s32.totalorder %s90, %s104
    %p106 = scmp.eq.s32.totalorder %s17, 0
    %p107 = por %p105, %p106
    %s109 = sadd.s32 %s108, 1
    %p112 = scmp.eq.s32.totalorder %s11, 1
    %p113 = scmp.ne.s32.totalorder %s108, %s110
    %p114 = scmp.eq.s32.totalorder %s11, 0
    %p115 = por %p113, %p114
    %p116 = scmp.ne.s32.totalorder %s108, %s110
    %p117 = scmp.eq.s32.totalorder %s16, 1
    %p118 = por %p116, %p117
    %p119 = scmp.ne.s32.totalorder %s110, %s111
    %p120 = scmp.eq.s32.totalorder %s16, 0
    %p121 = por %p119, %p120
    %p122 = scmp.ne.s32.totalorder %s110, %s111
    %p123 = scmp.eq.s32.totalorder %s17, 1
    %p124 = por %p122, %p123
    %p126 = scmp.ne.s32.totalorder %s111, %s125
    %p127 = scmp.eq.s32.totalorder %s17, 0
    %p128 = por %p126, %p127
    %s129 = ssub.s32 %s11, %s18
    %p130 = scmp.eq.s32.totalorder %s129, 0
    %s132 = sadd.s32 %s131, 1
    %s133 = scalar_select %p130, %s131, %s132
    %p136 = pneg %p130
    %p137 = scmp.eq.s32.totalorder %s11, 1
    %p138 = por %p136, %p137
    %p139 = scmp.ne.s32.totalorder %s131, %s134
    %p140 = scmp.eq.s32.totalorder %s11, 0
    %p141 = por %p139, %p140
    %p142 = scmp.ne.s32.totalorder %s131, %s134
    %p143 = scmp.eq.s32.totalorder %s16, 1
    %p144 = por %p142, %p143
    %p145 = scmp.ne.s32.totalorder %s134, %s135
    %p146 = scmp.eq.s32.totalorder %s16, 0
    %p147 = por %p145, %p146
    %p148 = scmp.ne.s32.totalorder %s134, %s135
    %p149 = scmp.eq.s32.totalorder %s17, 1
    %p150 = por %p148, %p149
    %p152 = scmp.ne.s32.totalorder %s135, %s151
    %p153 = scmp.eq.s32.totalorder %s17, 0
    %p154 = por %p152, %p153
    %p155 = scmp.le.s32.totalorder 1, %s11
    %p156 = scmp.lt.s32.totalorder %s11, 3
    %p157 = pnand %p155, %p156
    %p158 = pneg %p157
    // Predicated region
    $region9: #{merging_block_forward.1} parent=5 // pred_check
      _
    $region10: #{merging_block_forward.1} parent=5 // pred_check_branch
      %160 = sbr.rel (%p157) target = $region12
    $region11: #{merging_block_forward.1} parent=5 // pred_region
      %s161 = ssub.s32 %s11, 1
      // Predicated region
      $region13: #{merging_block_forward.1} parent=11 // pred_check
        %p162 = pneg %p58
      $region14: #{merging_block_forward.1} parent=11 // pred_check_branch
        %164 = sbr.rel (%p162) target = $region16
      $region15: #{merging_block_forward.1} parent=11 // pred_region
        _
      $region16: #{merging_block_forward.1} parent=11 // pred_fallthru
        _
      // Predicated region
      $region17: #{merging_block_forward.1} parent=11 // pred_check
        %p165 = pneg %p79
      $region18: #{merging_block_forward.1} parent=11 // pred_check_branch
        %167 = sbr.rel (%p165) target = $region20
      $region19: #{merging_block_forward.1} parent=11 // pred_region
        _
      $region20: #{merging_block_forward.1} parent=11 // pred_fallthru
        _
      // Predicated region
      $region21: #{merging_block_forward.1} parent=11 // pred_check
        %p168 = pneg %p100
      $region22: #{merging_block_forward.1} parent=11 // pred_check_branch
        %170 = sbr.rel (%p168) target = $region24
      $region23: #{merging_block_forward.1} parent=11 // pred_region
        _
      $region24: #{merging_block_forward.1} parent=11 // pred_fallthru
        _
      // Predicated region
      $region25: #{merging_block_forward.1} parent=11 // pred_check
        %p171 = pneg %p121
      $region26: #{merging_block_forward.1} parent=11 // pred_check_branch
        %173 = sbr.rel (%p171) target = $region28
      $region27: #{merging_block_forward.1} parent=11 // pred_region
        _
      $region28: #{merging_block_forward.1} parent=11 // pred_fallthru
        _
    $region12: #{merging_block_forward.1} parent=5 // pred_fallthru
      _
    %p174 = scmp.lt.s32.totalorder %s11, 2
    // Predicated region
    $region29: #{merging_block_forward.1} parent=5 // pred_check
      %p175 = pneg %p174
    $region30: #{merging_block_forward.1} parent=5 // pred_check_branch
      %177 = sbr.rel (%p175) target = $region32
    $region31: #{merging_block_forward.1} parent=5 // pred_region
      // Predicated region
      $region33: #{merging_block_forward.1} parent=31 // pred_check
        %p178 = pneg %p31
      $region34: #{merging_block_forward.1} parent=31 // pred_check_branch
        %180 = sbr.rel (%p178) target = $region36
      $region35: #{merging_block_forward.1} parent=31 // pred_region
        %p181 = scmp.lt.s32.totalorder %s11, 1
        %s182 = scalar_select %p181, %s11, 1
        %s183 = smul.addr %s182, 54
        %s184 = smul.addr %s183, 8
        %s185 = scalar_lea.vmem %s0, %s184
      $region36: #{merging_block_forward.1} parent=31 // pred_fallthru
        _
    $region32: #{merging_block_forward.1} parent=5 // pred_fallthru
      _
    %p186 = scmp.le.s32.totalorder 1, %s11
    %p187 = scmp.lt.s32.totalorder %s11, 3
    %p188 = pnand %p186, %p187
    %p189 = pneg %p188
    // Predicated region
    $region37: #{merging_block_forward.1} parent=5 // pred_check
      _
    $region38: #{merging_block_forward.1} parent=5 // pred_check_branch
      %191 = sbr.rel (%p188) target = $region40
    $region39: #{merging_block_forward.1} parent=5 // pred_region
      %s192 = ssub.s32 %s11, 1
      %p193 = scmp.lt.s32.totalorder %s16, 1
      %s194 = scalar_select %p193, %s16, 1
      %s195 = smul.addr %s194, 54
      %s196 = smul.addr %s195, 8
      %s197 = scalar_lea.vmem %s0, %s196
      %p198 = pneg %p37
      %p199 = pneg %p34
      %p200 = pneg %p58
      %p201 = pneg %p55
      %p202 = pneg %p79
      %p203 = pneg %p76
      %p204 = pneg %p100
      %p205 = pneg %p97
      %p206 = pneg %p121
      %p207 = pneg %p118
      %p208 = pneg %p147
      %p209 = pneg %p144
      %s210 = smul.u32 16, %s16
      %p211 = scmp.lt.s32.totalorder %s210, 31
      %s212 = scalar_select %p211, %s210, 31
      %s213 = smul.addr %s212, 8
      %s214 = scalar_lea.vmem %s5, %s213
      %p215 = scmp.lt.s32.totalorder %s16, 1
      %s216 = scalar_select %p215, %s16, 1
      %s217 = smul.addr %s216, 54
      %s218 = smul.addr %s217, 8
      %s219 = scalar_lea.vmem %s0, %s218
      %s220 = smul.u32 16, %s16
      %p221 = scmp.lt.s32.totalorder %s220, 31
      %s222 = scalar_select %p221, %s220, 31
      %s223 = smul.addr %s222, 8
      %s224 = scalar_lea.vmem %s5, %s223
      %s225 = smul.u32 16, %s16
      %v227 = vld [vmem:[%s219] sm:$0xff]
      %v228 = vld [vmem:[%s219 + $0x8] sm:$0xff]
      %v229 = vld [vmem:[%s219 + $0x10] sm:$0xf]
      %v230 = vld [vmem:[%s219 + $0x18] sm:$0xff]
      %v231 = vld [vmem:[%s219 + $0x20] sm:$0xff]
      %v232 = vld [vmem:[%s219 + $0x28] sm:$0xf]
      %v233 = vld [vmem:[%s219 + $0x30] sm:$0xff]
      %v234 = vld [vmem:[%s219 + $0x38] sm:$0xff]
      %v235 = vld [vmem:[%s219 + $0x40] sm:$0xf]
      %v236 = vld [vmem:[%s219 + $0x48] sm:$0xff]
      %v237 = vld [vmem:[%s219 + $0x50] sm:$0xff]
      %v238 = vld [vmem:[%s219 + $0x58] sm:$0xf]
      %v239 = vld [vmem:[%s219 + $0x60] sm:$0xff]
      %v240 = vld [vmem:[%s219 + $0x68] sm:$0xff]
      %v241 = vld [vmem:[%s219 + $0x70] sm:$0xf]
      %v242 = vld [vmem:[%s219 + $0x78] sm:$0xff]
      %v243 = vld [vmem:[%s219 + $0x80] sm:$0xff]
      %v244 = vld [vmem:[%s219 + $0x88] sm:$0xf]
      %v245 = vld [vmem:[%s219 + $0x90] sm:$0xff]
      %v246 = vld [vmem:[%s219 + $0x98] sm:$0xff]
      %v247 = vld [vmem:[%s219 + $0xa0] sm:$0xf]
      %v248 = vld [vmem:[%s219 + $0xa8] sm:$0xff]
      %v249 = vld [vmem:[%s219 + $0xb0] sm:$0xff]
      %v250 = vld [vmem:[%s219 + $0xb8] sm:$0xf]
      %v251 = vld [vmem:[%s219 + $0xc0] sm:$0xff]
      %v252 = vld [vmem:[%s219 + $0xc8] sm:$0xff]
      %v253 = vld [vmem:[%s219 + $0xd0] sm:$0xf]
      %v254 = vld [vmem:[%s219 + $0xd8] sm:$0xff]
      %v255 = vld [vmem:[%s219 + $0xe0] sm:$0xff]
      %v256 = vld [vmem:[%s219 + $0xe8] sm:$0xf]
      %v257 = vld [vmem:[%s219 + $0xf0] sm:$0xff]
      %v258 = vld [vmem:[%s219 + $0xf8] sm:$0xff]
      %v259 = vld [vmem:[%s219 + $0x100] sm:$0xf]
      %v260 = vld [vmem:[%s219 + $0x108] sm:$0xff]
      %v261 = vld [vmem:[%s219 + $0x110] sm:$0xff]
      %v262 = vld [vmem:[%s219 + $0x118] sm:$0xf]
      %v263 = vld [vmem:[%s219 + $0x120] sm:$0xff]
      %v264 = vld [vmem:[%s219 + $0x128] sm:$0xff]
      %v265 = vld [vmem:[%s219 + $0x130] sm:$0xf]
      %v266 = vld [vmem:[%s219 + $0x138] sm:$0xff]
      %v267 = vld [vmem:[%s219 + $0x140] sm:$0xff]
      %v268 = vld [vmem:[%s219 + $0x148] sm:$0xf]
      %v269 = vld [vmem:[%s219 + $0x150] sm:$0xff]
      %v270 = vld [vmem:[%s219 + $0x158] sm:$0xff]
      %v271 = vld [vmem:[%s219 + $0x160] sm:$0xf]
      %v272 = vld [vmem:[%s219 + $0x168] sm:$0xff]
      %v273 = vld [vmem:[%s219 + $0x170] sm:$0xff]
      %v274 = vld [vmem:[%s219 + $0x178] sm:$0xf]
      %v275 = vld [vmem:[%s219 + $0x180] sm:$0xff]
      %v276 = vld [vmem:[%s219 + $0x188] sm:$0xff]
      %v277 = vld [vmem:[%s219 + $0x190] sm:$0xf]
      %v278 = vlaneseq
      %v279 = vshrl.u32 %v278, 7
      %v280 = vadd.s32 %v279, 8
      %v281 = vadd.s32 %v279, 16
      %vm282 = vcmp.lt.s32.totalorder %v279, 2
      %vm283 = vcmp.lt.s32.totalorder %v280, 2
      %vm284 = vcmp.lt.s32.totalorder %v281, 2
      %vm285 = vcmp.ge.s32.totalorder %v279, 18
      %vm286 = vcmp.ge.s32.totalorder %v280, 18
      %vm287 = vcmp.ge.s32.totalorder %v281, 18
      %vm288 = vmor %vm282, %vm285
      %vm289 = vmor %vm283, %vm286
      %vm290 = vmor %vm284, %vm287
      %v291 = vsel %vm288, 1, 0
      %v292 = vsel %vm289, 1, 0
      %v293 = vsel %vm290, 1, 0
      %vm294 = vcmp.eq.s32.totalorder %v291, 1
      %vm295 = vcmp.eq.s32.totalorder %v292, 1
      %vm296 = vcmp.eq.s32.totalorder %v293, 1
      %v297 = vsel %vm294, -3.4028235e+38, %v227
      %v298 = vsel %vm295, -3.4028235e+38, %v228
      %v299 = vsel %vm296, -3.4028235e+38, %v229
      %v300 = vsel %vm294, -3.4028235e+38, %v230
      %v301 = vsel %vm295, -3.4028235e+38, %v231
      %v302 = vsel %vm296, -3.4028235e+38, %v232
      %v303 = vsel %vm294, -3.4028235e+38, %v233
      %v304 = vsel %vm295, -3.4028235e+38, %v234
      %v305 = vsel %vm296, -3.4028235e+38, %v235
      %v306 = vsel %vm294, -3.4028235e+38, %v236
      %v307 = vsel %vm295, -3.4028235e+38, %v237
      %v308 = vsel %vm296, -3.4028235e+38, %v238
      %v309 = vsel %vm294, -3.4028235e+38, %v239
      %v310 = vsel %vm295, -3.4028235e+38, %v240
      %v311 = vsel %vm296, -3.4028235e+38, %v241
      %v312 = vsel %vm294, -3.4028235e+38, %v242
      %v313 = vsel %vm295, -3.4028235e+38, %v243
      %v314 = vsel %vm296, -3.4028235e+38, %v244
      %v315 = vsel %vm294, -3.4028235e+38, %v245
      %v316 = vsel %vm295, -3.4028235e+38, %v246
      %v317 = vsel %vm296, -3.4028235e+38, %v247
      %v318 = vsel %vm294, -3.4028235e+38, %v248
      %v319 = vsel %vm295, -3.4028235e+38, %v249
      %v320 = vsel %vm296, -3.4028235e+38, %v250
      %v321 = vsel %vm294, -3.4028235e+38, %v251
      %v322 = vsel %vm295, -3.4028235e+38, %v252
      %v323 = vsel %vm296, -3.4028235e+38, %v253
      %v324 = vsel %vm294, -3.4028235e+38, %v254
      %v325 = vsel %vm295, -3.4028235e+38, %v255
      %v326 = vsel %vm296, -3.4028235e+38, %v256
      %v327 = vsel %vm294, -3.4028235e+38, %v257
      %v328 = vsel %vm295, -3.4028235e+38, %v258
      %v329 = vsel %vm296, -3.4028235e+38, %v259
      %v330 = vsel %vm294, -3.4028235e+38, %v260
      %v331 = vsel %vm295, -3.4028235e+38, %v261
      %v332 = vsel %vm296, -3.4028235e+38, %v262
      %v333 = vsel %vm294, -3.4028235e+38, %v263
      %v334 = vsel %vm295, -3.4028235e+38, %v264
      %v335 = vsel %vm296, -3.4028235e+38, %v265
      %v336 = vsel %vm294, -3.4028235e+38, %v266
      %v337 = vsel %vm295, -3.4028235e+38, %v267
      %v338 = vsel %vm296, -3.4028235e+38, %v268
      %v339 = vsel %vm294, -3.4028235e+38, %v269
      %v340 = vsel %vm295, -3.4028235e+38, %v270
      %v341 = vsel %vm296, -3.4028235e+38, %v271
      %v342 = vsel %vm294, -3.4028235e+38, %v272
      %v343 = vsel %vm295, -3.4028235e+38, %v273
      %v344 = vsel %vm296, -3.4028235e+38, %v274
      %v345 = vsel %vm294, -3.4028235e+38, %v275
      %v346 = vsel %vm295, -3.4028235e+38, %v276
      %v347 = vsel %vm296, -3.4028235e+38, %v277
      %v348 = vadd.f32 %v227, %v230
      %v349 = vadd.f32 %v228, %v231
      %v350 = vadd.f32 %v229, %v232
      %v351 = vadd.f32 %v233, %v236
      %v352 = vadd.f32 %v234, %v237
      %v353 = vadd.f32 %v235, %v238
      %v354 = vadd.f32 %v239, %v242
      %v355 = vadd.f32 %v240, %v243
      %v356 = vadd.f32 %v241, %v244
      %v357 = vadd.f32 %v245, %v248
      %v358 = vadd.f32 %v246, %v249
      %v359 = vadd.f32 %v247, %v250
      %v360 = vadd.f32 %v251, %v254
      %v361 = vadd.f32 %v252, %v255
      %v362 = vadd.f32 %v253, %v256
      %v363 = vadd.f32 %v257, %v260
      %v364 = vadd.f32 %v258, %v261
      %v365 = vadd.f32 %v259, %v262
      %v366 = vadd.f32 %v263, %v266
      %v367 = vadd.f32 %v264, %v267
      %v368 = vadd.f32 %v265, %v268
      %v369 = vadd.f32 %v269, %v272
      %v370 = vadd.f32 %v270, %v273
      %v371 = vadd.f32 %v271, %v274
      %v372 = vadd.f32 %v348, %v233
      %v373 = vadd.f32 %v349, %v234
      %v374 = vadd.f32 %v350, %v235
      %v375 = vadd.f32 %v351, %v239
      %v376 = vadd.f32 %v352, %v240
      %v377 = vadd.f32 %v353, %v241
      %v378 = vadd.f32 %v354, %v245
      %v379 = vadd.f32 %v355, %v246
      %v380 = vadd.f32 %v356, %v247
      %v381 = vadd.f32 %v357, %v251
      %v382 = vadd.f32 %v358, %v252
      %v383 = vadd.f32 %v359, %v253
      %v384 = vadd.f32 %v360, %v257
      %v385 = vadd.f32 %v361, %v258
      %v386 = vadd.f32 %v362, %v259
      %v387 = vadd.f32 %v363, %v263
      %v388 = vadd.f32 %v364, %v264
      %v389 = vadd.f32 %v365, %v265
      %v390 = vadd.f32 %v366, %v269
      %v391 = vadd.f32 %v367, %v270
      %v392 = vadd.f32 %v368, %v271
      %v393 = vadd.f32 %v369, %v275
      %v394 = vadd.f32 %v370, %v276
      %v395 = vadd.f32 %v371, %v277
      %v396 = vmax.f32 %v297, %v300
      %v397 = vmax.f32 %v298, %v301
      %v398 = vmax.f32 %v299, %v302
      %v399 = vmax.f32 %v303, %v306
      %v400 = vmax.f32 %v304, %v307
      %v401 = vmax.f32 %v305, %v308
      %v402 = vmax.f32 %v309, %v312
      %v403 = vmax.f32 %v310, %v313
      %v404 = vmax.f32 %v311, %v314
      %v405 = vmax.f32 %v315, %v318
      %v406 = vmax.f32 %v316, %v319
      %v407 = vmax.f32 %v317, %v320
      %v408 = vmax.f32 %v321, %v324
      %v409 = vmax.f32 %v322, %v325
      %v410 = vmax.f32 %v323, %v326
      %v411 = vmax.f32 %v327, %v330
      %v412 = vmax.f32 %v328, %v331
      %v413 = vmax.f32 %v329, %v332
      %v414 = vmax.f32 %v333, %v336
      %v415 = vmax.f32 %v334, %v337
      %v416 = vmax.f32 %v335, %v338
      %v417 = vmax.f32 %v339, %v342
      %v418 = vmax.f32 %v340, %v343
      %v419 = vmax.f32 %v341, %v344
      %v420 = vmax.f32 %v396, %v303
      %v421 = vmax.f32 %v397, %v304
      %v422 = vmax.f32 %v398, %v305
      %v423 = vmax.f32 %v399, %v309
      %v424 = vmax.f32 %v400, %v310
      %v425 = vmax.f32 %v401, %v311
      %v426 = vmax.f32 %v402, %v315
      %v427 = vmax.f32 %v403, %v316
      %v428 = vmax.f32 %v404, %v317
      %v429 = vmax.f32 %v405, %v321
      %v430 = vmax.f32 %v406, %v322
      %v431 = vmax.f32 %v407, %v323
      %v432 = vmax.f32 %v408, %v327
      %v433 = vmax.f32 %v409, %v328
      %v434 = vmax.f32 %v410, %v329
      %v435 = vmax.f32 %v411, %v333
      %v436 = vmax.f32 %v412, %v334
      %v437 = vmax.f32 %v413, %v335
      %v438 = vmax.f32 %v414, %v339
      %v439 = vmax.f32 %v415, %v340
      %v440 = vmax.f32 %v416, %v341
      %v441 = vmax.f32 %v417, %v345
      %v442 = vmax.f32 %v418, %v346
      %v443 = vmax.f32 %v419, %v347
      %v444 = vmax.f32 %v300, %v303
      %v445 = vmax.f32 %v301, %v304
      %v446 = vmax.f32 %v302, %v305
      %v447 = vmax.f32 %v306, %v309
      %v448 = vmax.f32 %v307, %v310
      %v449 = vmax.f32 %v308, %v311
      %v450 = vmax.f32 %v312, %v315
      %v451 = vmax.f32 %v313, %v316
      %v452 = vmax.f32 %v314, %v317
      %v453 = vmax.f32 %v318, %v321
      %v454 = vmax.f32 %v319, %v322
      %v455 = vmax.f32 %v320, %v323
      %v456 = vmax.f32 %v324, %v327
      %v457 = vmax.f32 %v325, %v328
      %v458 = vmax.f32 %v326, %v329
      %v459 = vmax.f32 %v330, %v333
      %v460 = vmax.f32 %v331, %v334
      %v461 = vmax.f32 %v332, %v335
      %v462 = vmax.f32 %v336, %v339
      %v463 = vmax.f32 %v337, %v340
      %v464 = vmax.f32 %v338, %v341
      %v465 = vmax.f32 %v342, %v345
      %v466 = vmax.f32 %v343, %v346
      %v467 = vmax.f32 %v344, %v347
      %vm492 = vcmask 1046528
      %v493 = vrot.slane %v372, 1
      %v494 = vrot.slane %v373, 1
      %v495 = vsel %vm492, %v493, %v494
      %v496 = vrot.slane %v374, 1
      %v497 = vsel %vm492, %v494, %v496
      %v498 = vrot.slane %v375, 1
      %v499 = vrot.slane %v376, 1
      %v500 = vsel %vm492, %v498, %v499
      %v501 = vrot.slane %v377, 1
      %v502 = vsel %vm492, %v499, %v501
      %v503 = vrot.slane %v378, 1
      %v504 = vrot.slane %v379, 1
      %v505 = vsel %vm492, %v503, %v504
      %v506 = vrot.slane %v380, 1
      %v507 = vsel %vm492, %v504, %v506
      %v508 = vrot.slane %v381, 1
      %v509 = vrot.slane %v382, 1
      %v510 = vsel %vm492, %v508, %v509
      %v511 = vrot.slane %v383, 1
      %v512 = vsel %vm492, %v509, %v511
      %v513 = vrot.slane %v384, 1
      %v514 = vrot.slane %v385, 1
      %v515 = vsel %vm492, %v513, %v514
      %v516 = vrot.slane %v386, 1
      %v517 = vsel %vm492, %v514, %v516
      %v518 = vrot.slane %v387, 1
      %v519 = vrot.slane %v388, 1
      %v520 = vsel %vm492, %v518, %v519
      %v521 = vrot.slane %v389, 1
      %v522 = vsel %vm492, %v519, %v521
      %v523 = vrot.slane %v390, 1
      %v524 = vrot.slane %v391, 1
      %v525 = vsel %vm492, %v523, %v524
      %v526 = vrot.slane %v392, 1
      %v527 = vsel %vm492, %v524, %v526
      %v528 = vrot.slane %v393, 1
      %v529 = vrot.slane %v394, 1
      %v530 = vsel %vm492, %v528, %v529
      %v531 = vrot.slane %v395, 1
      %v532 = vsel %vm492, %v529, %v531
      %v549 = vadd.f32 %v372, %v495
      %v550 = vadd.f32 %v373, %v497
      %v551 = vadd.f32 %v375, %v500
      %v552 = vadd.f32 %v376, %v502
      %v553 = vadd.f32 %v378, %v505
      %v554 = vadd.f32 %v379, %v507
      %v555 = vadd.f32 %v381, %v510
      %v556 = vadd.f32 %v382, %v512
      %v557 = vadd.f32 %v384, %v515
      %v558 = vadd.f32 %v385, %v517
      %v559 = vadd.f32 %v387, %v520
      %v560 = vadd.f32 %v388, %v522
      %v561 = vadd.f32 %v390, %v525
      %v562 = vadd.f32 %v391, %v527
      %v563 = vadd.f32 %v393, %v530
      %v564 = vadd.f32 %v394, %v532
      %vm565 = vcmask 1045504
      %v566 = vrot.slane %v372, 2
      %v567 = vrot.slane %v373, 2
      %v568 = vsel %vm565, %v566, %v567
      %v569 = vrot.slane %v374, 2
      %v570 = vsel %vm565, %v567, %v569
      %v571 = vrot.slane %v375, 2
      %v572 = vrot.slane %v376, 2
      %v573 = vsel %vm565, %v571, %v572
      %v574 = vrot.slane %v377, 2
      %v575 = vsel %vm565, %v572, %v574
      %v576 = vrot.slane %v378, 2
      %v577 = vrot.slane %v379, 2
      %v578 = vsel %vm565, %v576, %v577
      %v579 = vrot.slane %v380, 2
      %v580 = vsel %vm565, %v577, %v579
      %v581 = vrot.slane %v381, 2
      %v582 = vrot.slane %v382, 2
      %v583 = vsel %vm565, %v581, %v582
      %v584 = vrot.slane %v383, 2
      %v585 = vsel %vm565, %v582, %v584
      %v586 = vrot.slane %v384, 2
      %v587 = vrot.slane %v385, 2
      %v588 = vsel %vm565, %v586, %v587
      %v589 = vrot.slane %v386, 2
      %v590 = vsel %vm565, %v587, %v589
      %v591 = vrot.slane %v387, 2
      %v592 = vrot.slane %v388, 2
      %v593 = vsel %vm565, %v591, %v592
      %v594 = vrot.slane %v389, 2
      %v595 = vsel %vm565, %v592, %v594
      %v596 = vrot.slane %v390, 2
      %v597 = vrot.slane %v391, 2
      %v598 = vsel %vm565, %v596, %v597
      %v599 = vrot.slane %v392, 2
      %v600 = vsel %vm565, %v597, %v599
      %v601 = vrot.slane %v393, 2
      %v602 = vrot.slane %v394, 2
      %v603 = vsel %vm565, %v601, %v602
      %v604 = vrot.slane %v395, 2
      %v605 = vsel %vm565, %v602, %v604
      %v622 = vadd.f32 %v549, %v568
      %v623 = vadd.f32 %v550, %v570
      %v624 = vadd.f32 %v551, %v573
      %v625 = vadd.f32 %v552, %v575
      %v626 = vadd.f32 %v553, %v578
      %v627 = vadd.f32 %v554, %v580
      %v628 = vadd.f32 %v555, %v583
      %v629 = vadd.f32 %v556, %v585
      %v630 = vadd.f32 %v557, %v588
      %v631 = vadd.f32 %v558, %v590
      %v632 = vadd.f32 %v559, %v593
      %v633 = vadd.f32 %v560, %v595
      %v634 = vadd.f32 %v561, %v598
      %v635 = vadd.f32 %v562, %v600
      %v636 = vadd.f32 %v563, %v603
      %v637 = vadd.f32 %v564, %v605
      %vm638 = vcmask 1044480
      %v639 = vrot.slane %v372, 3
      %v640 = vrot.slane %v373, 3
      %v641 = vsel %vm638, %v639, %v640
      %v642 = vrot.slane %v374, 3
      %v643 = vsel %vm638, %v640, %v642
      %v644 = vrot.slane %v375, 3
      %v645 = vrot.slane %v376, 3
      %v646 = vsel %vm638, %v644, %v645
      %v647 = vrot.slane %v377, 3
      %v648 = vsel %vm638, %v645, %v647
      %v649 = vrot.slane %v378, 3
      %v650 = vrot.slane %v379, 3
      %v651 = vsel %vm638, %v649, %v650
      %v652 = vrot.slane %v380, 3
      %v653 = vsel %vm638, %v650, %v652
      %v654 = vrot.slane %v381, 3
      %v655 = vrot.slane %v382, 3
      %v656 = vsel %vm638, %v654, %v655
      %v657 = vrot.slane %v383, 3
      %v658 = vsel %vm638, %v655, %v657
      %v659 = vrot.slane %v384, 3
      %v660 = vrot.slane %v385, 3
      %v661 = vsel %vm638, %v659, %v660
      %v662 = vrot.slane %v386, 3
      %v663 = vsel %vm638, %v660, %v662
      %v664 = vrot.slane %v387, 3
      %v665 = vrot.slane %v388, 3
      %v666 = vsel %vm638, %v664, %v665
      %v667 = vrot.slane %v389, 3
      %v668 = vsel %vm638, %v665, %v667
      %v669 = vrot.slane %v390, 3
      %v670 = vrot.slane %v391, 3
      %v671 = vsel %vm638, %v669, %v670
      %v672 = vrot.slane %v392, 3
      %v673 = vsel %vm638, %v670, %v672
      %v674 = vrot.slane %v393, 3
      %v675 = vrot.slane %v394, 3
      %v676 = vsel %vm638, %v674, %v675
      %v677 = vrot.slane %v395, 3
      %v678 = vsel %vm638, %v675, %v677
      %v695 = vadd.f32 %v622, %v641
      %v696 = vadd.f32 %v623, %v643
      %v697 = vadd.f32 %v624, %v646
      %v698 = vadd.f32 %v625, %v648
      %v699 = vadd.f32 %v626, %v651
      %v700 = vadd.f32 %v627, %v653
      %v701 = vadd.f32 %v628, %v656
      %v702 = vadd.f32 %v629, %v658
      %v703 = vadd.f32 %v630, %v661
      %v704 = vadd.f32 %v631, %v663
      %v705 = vadd.f32 %v632, %v666
      %v706 = vadd.f32 %v633, %v668
      %v707 = vadd.f32 %v634, %v671
      %v708 = vadd.f32 %v635, %v673
      %v709 = vadd.f32 %v636, %v676
      %v710 = vadd.f32 %v637, %v678
      %vm711 = vcmask 1043456
      %v712 = vrot.slane %v372, 4
      %v713 = vrot.slane %v373, 4
      %v714 = vsel %vm711, %v712, %v713
      %v715 = vrot.slane %v374, 4
      %v716 = vsel %vm711, %v713, %v715
      %v717 = vrot.slane %v375, 4
      %v718 = vrot.slane %v376, 4
      %v719 = vsel %vm711, %v717, %v718
      %v720 = vrot.slane %v377, 4
      %v721 = vsel %vm711, %v718, %v720
      %v722 = vrot.slane %v378, 4
      %v723 = vrot.slane %v379, 4
      %v724 = vsel %vm711, %v722, %v723
      %v725 = vrot.slane %v380, 4
      %v726 = vsel %vm711, %v723, %v725
      %v727 = vrot.slane %v381, 4
      %v728 = vrot.slane %v382, 4
      %v729 = vsel %vm711, %v727, %v728
      %v730 = vrot.slane %v383, 4
      %v731 = vsel %vm711, %v728, %v730
      %v732 = vrot.slane %v384, 4
      %v733 = vrot.slane %v385, 4
      %v734 = vsel %vm711, %v732, %v733
      %v735 = vrot.slane %v386, 4
      %v736 = vsel %vm711, %v733, %v735
      %v737 = vrot.slane %v387, 4
      %v738 = vrot.slane %v388, 4
      %v739 = vsel %vm711, %v737, %v738
      %v740 = vrot.slane %v389, 4
      %v741 = vsel %vm711, %v738, %v740
      %v742 = vrot.slane %v390, 4
      %v743 = vrot.slane %v391, 4
      %v744 = vsel %vm711, %v742, %v743
      %v745 = vrot.slane %v392, 4
      %v746 = vsel %vm711, %v743, %v745
      %v747 = vrot.slane %v393, 4
      %v748 = vrot.slane %v394, 4
      %v749 = vsel %vm711, %v747, %v748
      %v750 = vrot.slane %v395, 4
      %v751 = vsel %vm711, %v748, %v750
      %v768 = vadd.f32 %v695, %v714
      %v769 = vadd.f32 %v696, %v716
      %v770 = vadd.f32 %v697, %v719
      %v771 = vadd.f32 %v698, %v721
      %v772 = vadd.f32 %v699, %v724
      %v773 = vadd.f32 %v700, %v726
      %v774 = vadd.f32 %v701, %v729
      %v775 = vadd.f32 %v702, %v731
      %v776 = vadd.f32 %v703, %v734
      %v777 = vadd.f32 %v704, %v736
      %v778 = vadd.f32 %v705, %v739
      %v779 = vadd.f32 %v706, %v741
      %v780 = vadd.f32 %v707, %v744
      %v781 = vadd.f32 %v708, %v746
      %v782 = vadd.f32 %v709, %v749
      %v783 = vadd.f32 %v710, %v751
      %v808 = vrot.slane %v420, 1
      %v809 = vrot.slane %v421, 1
      %v810 = vsel %vm492, %v808, %v809
      %v811 = vrot.slane %v422, 1
      %v812 = vsel %vm492, %v809, %v811
      %v813 = vrot.slane %v423, 1
      %v814 = vrot.slane %v424, 1
      %v815 = vsel %vm492, %v813, %v814
      %v816 = vrot.slane %v425, 1
      %v817 = vsel %vm492, %v814, %v816
      %v818 = vrot.slane %v426, 1
      %v819 = vrot.slane %v427, 1
      %v820 = vsel %vm492, %v818, %v819
      %v821 = vrot.slane %v428, 1
      %v822 = vsel %vm492, %v819, %v821
      %v823 = vrot.slane %v429, 1
      %v824 = vrot.slane %v430, 1
      %v825 = vsel %vm492, %v823, %v824
      %v826 = vrot.slane %v431, 1
      %v827 = vsel %vm492, %v824, %v826
      %v828 = vrot.slane %v432, 1
      %v829 = vrot.slane %v433, 1
      %v830 = vsel %vm492, %v828, %v829
      %v831 = vrot.slane %v434, 1
      %v832 = vsel %vm492, %v829, %v831
      %v833 = vrot.slane %v435, 1
      %v834 = vrot.slane %v436, 1
      %v835 = vsel %vm492, %v833, %v834
      %v836 = vrot.slane %v437, 1
      %v837 = vsel %vm492, %v834, %v836
      %v838 = vrot.slane %v438, 1
      %v839 = vrot.slane %v439, 1
      %v840 = vsel %vm492, %v838, %v839
      %v841 = vrot.slane %v440, 1
      %v842 = vsel %vm492, %v839, %v841
      %v843 = vrot.slane %v441, 1
      %v844 = vrot.slane %v442, 1
      %v845 = vsel %vm492, %v843, %v844
      %v846 = vrot.slane %v443, 1
      %v847 = vsel %vm492, %v844, %v846
      %v864 = vmax.f32 %v420, %v810
      %v865 = vmax.f32 %v421, %v812
      %v866 = vmax.f32 %v423, %v815
      %v867 = vmax.f32 %v424, %v817
      %v868 = vmax.f32 %v426, %v820
      %v869 = vmax.f32 %v427, %v822
      %v870 = vmax.f32 %v429, %v825
      %v871 = vmax.f32 %v430, %v827
      %v872 = vmax.f32 %v432, %v830
      %v873 = vmax.f32 %v433, %v832
      %v874 = vmax.f32 %v435, %v835
      %v875 = vmax.f32 %v436, %v837
      %v876 = vmax.f32 %v438, %v840
      %v877 = vmax.f32 %v439, %v842
      %v878 = vmax.f32 %v441, %v845
      %v879 = vmax.f32 %v442, %v847
      %v880 = vrot.slane %v420, 2
      %v881 = vrot.slane %v421, 2
      %v882 = vsel %vm565, %v880, %v881
      %v883 = vrot.slane %v422, 2
      %v884 = vsel %vm565, %v881, %v883
      %v885 = vrot.slane %v423, 2
      %v886 = vrot.slane %v424, 2
      %v887 = vsel %vm565, %v885, %v886
      %v888 = vrot.slane %v425, 2
      %v889 = vsel %vm565, %v886, %v888
      %v890 = vrot.slane %v426, 2
      %v891 = vrot.slane %v427, 2
      %v892 = vsel %vm565, %v890, %v891
      %v893 = vrot.slane %v428, 2
      %v894 = vsel %vm565, %v891, %v893
      %v895 = vrot.slane %v429, 2
      %v896 = vrot.slane %v430, 2
      %v897 = vsel %vm565, %v895, %v896
      %v898 = vrot.slane %v431, 2
      %v899 = vsel %vm565, %v896, %v898
      %v900 = vrot.slane %v432, 2
      %v901 = vrot.slane %v433, 2
      %v902 = vsel %vm565, %v900, %v901
      %v903 = vrot.slane %v434, 2
      %v904 = vsel %vm565, %v901, %v903
      %v905 = vrot.slane %v435, 2
      %v906 = vrot.slane %v436, 2
      %v907 = vsel %vm565, %v905, %v906
      %v908 = vrot.slane %v437, 2
      %v909 = vsel %vm565, %v906, %v908
      %v910 = vrot.slane %v438, 2
      %v911 = vrot.slane %v439, 2
      %v912 = vsel %vm565, %v910, %v911
      %v913 = vrot.slane %v440, 2
      %v914 = vsel %vm565, %v911, %v913
      %v915 = vrot.slane %v441, 2
      %v916 = vrot.slane %v442, 2
      %v917 = vsel %vm565, %v915, %v916
      %v918 = vrot.slane %v443, 2
      %v919 = vsel %vm565, %v916, %v918
      %v936 = vmax.f32 %v864, %v882
      %v937 = vmax.f32 %v865, %v884
      %v938 = vmax.f32 %v866, %v887
      %v939 = vmax.f32 %v867, %v889
      %v940 = vmax.f32 %v868, %v892
      %v941 = vmax.f32 %v869, %v894
      %v942 = vmax.f32 %v870, %v897
      %v943 = vmax.f32 %v871, %v899
      %v944 = vmax.f32 %v872, %v902
      %v945 = vmax.f32 %v873, %v904
      %v946 = vmax.f32 %v874, %v907
      %v947 = vmax.f32 %v875, %v909
      %v948 = vmax.f32 %v876, %v912
      %v949 = vmax.f32 %v877, %v914
      %v950 = vmax.f32 %v878, %v917
      %v951 = vmax.f32 %v879, %v919
      %v952 = vrot.slane %v420, 3
      %v953 = vrot.slane %v421, 3
      %v954 = vsel %vm638, %v952, %v953
      %v955 = vrot.slane %v422, 3
      %v956 = vsel %vm638, %v953, %v955
      %v957 = vrot.slane %v423, 3
      %v958 = vrot.slane %v424, 3
      %v959 = vsel %vm638, %v957, %v958
      %v960 = vrot.slane %v425, 3
      %v961 = vsel %vm638, %v958, %v960
      %v962 = vrot.slane %v426, 3
      %v963 = vrot.slane %v427, 3
      %v964 = vsel %vm638, %v962, %v963
      %v965 = vrot.slane %v428, 3
      %v966 = vsel %vm638, %v963, %v965
      %v967 = vrot.slane %v429, 3
      %v968 = vrot.slane %v430, 3
      %v969 = vsel %vm638, %v967, %v968
      %v970 = vrot.slane %v431, 3
      %v971 = vsel %vm638, %v968, %v970
      %v972 = vrot.slane %v432, 3
      %v973 = vrot.slane %v433, 3
      %v974 = vsel %vm638, %v972, %v973
      %v975 = vrot.slane %v434, 3
      %v976 = vsel %vm638, %v973, %v975
      %v977 = vrot.slane %v435, 3
      %v978 = vrot.slane %v436, 3
      %v979 = vsel %vm638, %v977, %v978
      %v980 = vrot.slane %v437, 3
      %v981 = vsel %vm638, %v978, %v980
      %v982 = vrot.slane %v438, 3
      %v983 = vrot.slane %v439, 3
      %v984 = vsel %vm638, %v982, %v983
      %v985 = vrot.slane %v440, 3
      %v986 = vsel %vm638, %v983, %v985
      %v987 = vrot.slane %v441, 3
      %v988 = vrot.slane %v442, 3
      %v989 = vsel %vm638, %v987, %v988
      %v990 = vrot.slane %v443, 3
      %v991 = vsel %vm638, %v988, %v990
      %v1008 = vmax.f32 %v936, %v954
      %v1009 = vmax.f32 %v937, %v956
      %v1010 = vmax.f32 %v938, %v959
      %v1011 = vmax.f32 %v939, %v961
      %v1012 = vmax.f32 %v940, %v964
      %v1013 = vmax.f32 %v941, %v966
      %v1014 = vmax.f32 %v942, %v969
      %v1015 = vmax.f32 %v943, %v971
      %v1016 = vmax.f32 %v944, %v974
      %v1017 = vmax.f32 %v945, %v976
      %v1018 = vmax.f32 %v946, %v979
      %v1019 = vmax.f32 %v947, %v981
      %v1020 = vmax.f32 %v948, %v984
      %v1021 = vmax.f32 %v949, %v986
      %v1022 = vmax.f32 %v950, %v989
      %v1023 = vmax.f32 %v951, %v991
      %v1024 = vrot.slane %v420, 4
      %v1025 = vrot.slane %v421, 4
      %v1026 = vsel %vm711, %v1024, %v1025
      %v1027 = vrot.slane %v422, 4
      %v1028 = vsel %vm711, %v1025, %v1027
      %v1029 = vrot.slane %v423, 4
      %v1030 = vrot.slane %v424, 4
      %v1031 = vsel %vm711, %v1029, %v1030
      %v1032 = vrot.slane %v425, 4
      %v1033 = vsel %vm711, %v1030, %v1032
      %v1034 = vrot.slane %v426, 4
      %v1035 = vrot.slane %v427, 4
      %v1036 = vsel %vm711, %v1034, %v1035
      %v1037 = vrot.slane %v428, 4
      %v1038 = vsel %vm711, %v1035, %v1037
      %v1039 = vrot.slane %v429, 4
      %v1040 = vrot.slane %v430, 4
      %v1041 = vsel %vm711, %v1039, %v1040
      %v1042 = vrot.slane %v431, 4
      %v1043 = vsel %vm711, %v1040, %v1042
      %v1044 = vrot.slane %v432, 4
      %v1045 = vrot.slane %v433, 4
      %v1046 = vsel %vm711, %v1044, %v1045
      %v1047 = vrot.slane %v434, 4
      %v1048 = vsel %vm711, %v1045, %v1047
      %v1049 = vrot.slane %v435, 4
      %v1050 = vrot.slane %v436, 4
      %v1051 = vsel %vm711, %v1049, %v1050
      %v1052 = vrot.slane %v437, 4
      %v1053 = vsel %vm711, %v1050, %v1052
      %v1054 = vrot.slane %v438, 4
      %v1055 = vrot.slane %v439, 4
      %v1056 = vsel %vm711, %v1054, %v1055
      %v1057 = vrot.slane %v440, 4
      %v1058 = vsel %vm711, %v1055, %v1057
      %v1059 = vrot.slane %v441, 4
      %v1060 = vrot.slane %v442, 4
      %v1061 = vsel %vm711, %v1059, %v1060
      %v1062 = vrot.slane %v443, 4
      %v1063 = vsel %vm711, %v1060, %v1062
      %v1080 = vmax.f32 %v1008, %v1026
      %v1081 = vmax.f32 %v1009, %v1028
      %v1082 = vmax.f32 %v1010, %v1031
      %v1083 = vmax.f32 %v1011, %v1033
      %v1084 = vmax.f32 %v1012, %v1036
      %v1085 = vmax.f32 %v1013, %v1038
      %v1086 = vmax.f32 %v1014, %v1041
      %v1087 = vmax.f32 %v1015, %v1043
      %v1088 = vmax.f32 %v1016, %v1046
      %v1089 = vmax.f32 %v1017, %v1048
      %v1090 = vmax.f32 %v1018, %v1051
      %v1091 = vmax.f32 %v1019, %v1053
      %v1092 = vmax.f32 %v1020, %v1056
      %v1093 = vmax.f32 %v1021, %v1058
      %v1094 = vmax.f32 %v1022, %v1061
      %v1095 = vmax.f32 %v1023, %v1063
      %v1120 = vrot.slane %v444, 1
      %v1121 = vrot.slane %v445, 1
      %v1122 = vsel %vm492, %v1120, %v1121
      %v1123 = vrot.slane %v446, 1
      %v1124 = vsel %vm492, %v1121, %v1123
      %v1125 = vrot.slane %v447, 1
      %v1126 = vrot.slane %v448, 1
      %v1127 = vsel %vm492, %v1125, %v1126
      %v1128 = vrot.slane %v449, 1
      %v1129 = vsel %vm492, %v1126, %v1128
      %v1130 = vrot.slane %v450, 1
      %v1131 = vrot.slane %v451, 1
      %v1132 = vsel %vm492, %v1130, %v1131
      %v1133 = vrot.slane %v452, 1
      %v1134 = vsel %vm492, %v1131, %v1133
      %v1135 = vrot.slane %v453, 1
      %v1136 = vrot.slane %v454, 1
      %v1137 = vsel %vm492, %v1135, %v1136
      %v1138 = vrot.slane %v455, 1
      %v1139 = vsel %vm492, %v1136, %v1138
      %v1140 = vrot.slane %v456, 1
      %v1141 = vrot.slane %v457, 1
      %v1142 = vsel %vm492, %v1140, %v1141
      %v1143 = vrot.slane %v458, 1
      %v1144 = vsel %vm492, %v1141, %v1143
      %v1145 = vrot.slane %v459, 1
      %v1146 = vrot.slane %v460, 1
      %v1147 = vsel %vm492, %v1145, %v1146
      %v1148 = vrot.slane %v461, 1
      %v1149 = vsel %vm492, %v1146, %v1148
      %v1150 = vrot.slane %v462, 1
      %v1151 = vrot.slane %v463, 1
      %v1152 = vsel %vm492, %v1150, %v1151
      %v1153 = vrot.slane %v464, 1
      %v1154 = vsel %vm492, %v1151, %v1153
      %v1155 = vrot.slane %v465, 1
      %v1156 = vrot.slane %v466, 1
      %v1157 = vsel %vm492, %v1155, %v1156
      %v1158 = vrot.slane %v467, 1
      %v1159 = vsel %vm492, %v1156, %v1158
      %v1176 = vmax.f32 %v444, %v1122
      %v1177 = vmax.f32 %v445, %v1124
      %v1178 = vmax.f32 %v447, %v1127
      %v1179 = vmax.f32 %v448, %v1129
      %v1180 = vmax.f32 %v450, %v1132
      %v1181 = vmax.f32 %v451, %v1134
      %v1182 = vmax.f32 %v453, %v1137
      %v1183 = vmax.f32 %v454, %v1139
      %v1184 = vmax.f32 %v456, %v1142
      %v1185 = vmax.f32 %v457, %v1144
      %v1186 = vmax.f32 %v459, %v1147
      %v1187 = vmax.f32 %v460, %v1149
      %v1188 = vmax.f32 %v462, %v1152
      %v1189 = vmax.f32 %v463, %v1154
      %v1190 = vmax.f32 %v465, %v1157
      %v1191 = vmax.f32 %v466, %v1159
      %v1192 = vrot.slane %v444, 2
      %v1193 = vrot.slane %v445, 2
      %v1194 = vsel %vm565, %v1192, %v1193
      %v1195 = vrot.slane %v446, 2
      %v1196 = vsel %vm565, %v1193, %v1195
      %v1197 = vrot.slane %v447, 2
      %v1198 = vrot.slane %v448, 2
      %v1199 = vsel %vm565, %v1197, %v1198
      %v1200 = vrot.slane %v449, 2
      %v1201 = vsel %vm565, %v1198, %v1200
      %v1202 = vrot.slane %v450, 2
      %v1203 = vrot.slane %v451, 2
      %v1204 = vsel %vm565, %v1202, %v1203
      %v1205 = vrot.slane %v452, 2
      %v1206 = vsel %vm565, %v1203, %v1205
      %v1207 = vrot.slane %v453, 2
      %v1208 = vrot.slane %v454, 2
      %v1209 = vsel %vm565, %v1207, %v1208
      %v1210 = vrot.slane %v455, 2
      %v1211 = vsel %vm565, %v1208, %v1210
      %v1212 = vrot.slane %v456, 2
      %v1213 = vrot.slane %v457, 2
      %v1214 = vsel %vm565, %v1212, %v1213
      %v1215 = vrot.slane %v458, 2
      %v1216 = vsel %vm565, %v1213, %v1215
      %v1217 = vrot.slane %v459, 2
      %v1218 = vrot.slane %v460, 2
      %v1219 = vsel %vm565, %v1217, %v1218
      %v1220 = vrot.slane %v461, 2
      %v1221 = vsel %vm565, %v1218, %v1220
      %v1222 = vrot.slane %v462, 2
      %v1223 = vrot.slane %v463, 2
      %v1224 = vsel %vm565, %v1222, %v1223
      %v1225 = vrot.slane %v464, 2
      %v1226 = vsel %vm565, %v1223, %v1225
      %v1227 = vrot.slane %v465, 2
      %v1228 = vrot.slane %v466, 2
      %v1229 = vsel %vm565, %v1227, %v1228
      %v1230 = vrot.slane %v467, 2
      %v1231 = vsel %vm565, %v1228, %v1230
      %v1248 = vmax.f32 %v1176, %v1194
      %v1249 = vmax.f32 %v1177, %v1196
      %v1250 = vmax.f32 %v1178, %v1199
      %v1251 = vmax.f32 %v1179, %v1201
      %v1252 = vmax.f32 %v1180, %v1204
      %v1253 = vmax.f32 %v1181, %v1206
      %v1254 = vmax.f32 %v1182, %v1209
      %v1255 = vmax.f32 %v1183, %v1211
      %v1256 = vmax.f32 %v1184, %v1214
      %v1257 = vmax.f32 %v1185, %v1216
      %v1258 = vmax.f32 %v1186, %v1219
      %v1259 = vmax.f32 %v1187, %v1221
      %v1260 = vmax.f32 %v1188, %v1224
      %v1261 = vmax.f32 %v1189, %v1226
      %v1262 = vmax.f32 %v1190, %v1229
      %v1263 = vmax.f32 %v1191, %v1231
      %v1264 = vrot.slane %v444, 3
      %v1265 = vrot.slane %v445, 3
      %v1266 = vsel %vm638, %v1264, %v1265
      %v1267 = vrot.slane %v446, 3
      %v1268 = vsel %vm638, %v1265, %v1267
      %v1269 = vrot.slane %v447, 3
      %v1270 = vrot.slane %v448, 3
      %v1271 = vsel %vm638, %v1269, %v1270
      %v1272 = vrot.slane %v449, 3
      %v1273 = vsel %vm638, %v1270, %v1272
      %v1274 = vrot.slane %v450, 3
      %v1275 = vrot.slane %v451, 3
      %v1276 = vsel %vm638, %v1274, %v1275
      %v1277 = vrot.slane %v452, 3
      %v1278 = vsel %vm638, %v1275, %v1277
      %v1279 = vrot.slane %v453, 3
      %v1280 = vrot.slane %v454, 3
      %v1281 = vsel %vm638, %v1279, %v1280
      %v1282 = vrot.slane %v455, 3
      %v1283 = vsel %vm638, %v1280, %v1282
      %v1284 = vrot.slane %v456, 3
      %v1285 = vrot.slane %v457, 3
      %v1286 = vsel %vm638, %v1284, %v1285
      %v1287 = vrot.slane %v458, 3
      %v1288 = vsel %vm638, %v1285, %v1287
      %v1289 = vrot.slane %v459, 3
      %v1290 = vrot.slane %v460, 3
      %v1291 = vsel %vm638, %v1289, %v1290
      %v1292 = vrot.slane %v461, 3
      %v1293 = vsel %vm638, %v1290, %v1292
      %v1294 = vrot.slane %v462, 3
      %v1295 = vrot.slane %v463, 3
      %v1296 = vsel %vm638, %v1294, %v1295
      %v1297 = vrot.slane %v464, 3
      %v1298 = vsel %vm638, %v1295, %v1297
      %v1299 = vrot.slane %v465, 3
      %v1300 = vrot.slane %v466, 3
      %v1301 = vsel %vm638, %v1299, %v1300
      %v1302 = vrot.slane %v467, 3
      %v1303 = vsel %vm638, %v1300, %v1302
      %v1320 = vmax.f32 %v1248, %v1266
      %v1321 = vmax.f32 %v1249, %v1268
      %v1322 = vmax.f32 %v1250, %v1271
      %v1323 = vmax.f32 %v1251, %v1273
      %v1324 = vmax.f32 %v1252, %v1276
      %v1325 = vmax.f32 %v1253, %v1278
      %v1326 = vmax.f32 %v1254, %v1281
      %v1327 = vmax.f32 %v1255, %v1283
      %v1328 = vmax.f32 %v1256, %v1286
      %v1329 = vmax.f32 %v1257, %v1288
      %v1330 = vmax.f32 %v1258, %v1291
      %v1331 = vmax.f32 %v1259, %v1293
      %v1332 = vmax.f32 %v1260, %v1296
      %v1333 = vmax.f32 %v1261, %v1298
      %v1334 = vmax.f32 %v1262, %v1301
      %v1335 = vmax.f32 %v1263, %v1303
      %v1336 = vrot.slane %v444, 4
      %v1337 = vrot.slane %v445, 4
      %v1338 = vsel %vm711, %v1336, %v1337
      %v1339 = vrot.slane %v446, 4
      %v1340 = vsel %vm711, %v1337, %v1339
      %v1341 = vrot.slane %v447, 4
      %v1342 = vrot.slane %v448, 4
      %v1343 = vsel %vm711, %v1341, %v1342
      %v1344 = vrot.slane %v449, 4
      %v1345 = vsel %vm711, %v1342, %v1344
      %v1346 = vrot.slane %v450, 4
      %v1347 = vrot.slane %v451, 4
      %v1348 = vsel %vm711, %v1346, %v1347
      %v1349 = vrot.slane %v452, 4
      %v1350 = vsel %vm711, %v1347, %v1349
      %v1351 = vrot.slane %v453, 4
      %v1352 = vrot.slane %v454, 4
      %v1353 = vsel %vm711, %v1351, %v1352
      %v1354 = vrot.slane %v455, 4
      %v1355 = vsel %vm711, %v1352, %v1354
      %v1356 = vrot.slane %v456, 4
      %v1357 = vrot.slane %v457, 4
      %v1358 = vsel %vm711, %v1356, %v1357
      %v1359 = vrot.slane %v458, 4
      %v1360 = vsel %vm711, %v1357, %v1359
      %v1361 = vrot.slane %v459, 4
      %v1362 = vrot.slane %v460, 4
      %v1363 = vsel %vm711, %v1361, %v1362
      %v1364 = vrot.slane %v461, 4
      %v1365 = vsel %vm711, %v1362, %v1364
      %v1366 = vrot.slane %v462, 4
      %v1367 = vrot.slane %v463, 4
      %v1368 = vsel %vm711, %v1366, %v1367
      %v1369 = vrot.slane %v464, 4
      %v1370 = vsel %vm711, %v1367, %v1369
      %v1371 = vrot.slane %v465, 4
      %v1372 = vrot.slane %v466, 4
      %v1373 = vsel %vm711, %v1371, %v1372
      %v1374 = vrot.slane %v467, 4
      %v1375 = vsel %vm711, %v1372, %v1374
      %v1392 = vmax.f32 %v1320, %v1338
      %v1393 = vmax.f32 %v1321, %v1340
      %v1394 = vmax.f32 %v1322, %v1343
      %v1395 = vmax.f32 %v1323, %v1345
      %v1396 = vmax.f32 %v1324, %v1348
      %v1397 = vmax.f32 %v1325, %v1350
      %v1398 = vmax.f32 %v1326, %v1353
      %v1399 = vmax.f32 %v1327, %v1355
      %v1400 = vmax.f32 %v1328, %v1358
      %v1401 = vmax.f32 %v1329, %v1360
      %v1402 = vmax.f32 %v1330, %v1363
      %v1403 = vmax.f32 %v1331, %v1365
      %v1404 = vmax.f32 %v1332, %v1368
      %v1405 = vmax.f32 %v1333, %v1370
      %v1406 = vmax.f32 %v1334, %v1373
      %v1407 = vmax.f32 %v1335, %v1375
      %v1408 = vadd.s32 %v279, 24
      %v1409 = vadd.s32 %v279, 32
      %v1410 = vadd.s32 %v279, 40
      %v1411 = vadd.s32 %v279, 48
      %v1412 = vadd.s32 %v279, 56
      %v1413 = vadd.s32 %v279, 64
      %v1414 = vadd.s32 %v279, 72
      %v1415 = vadd.s32 %v279, 80
      %v1416 = vadd.s32 %v279, 88
      %v1417 = vadd.s32 %v279, 96
      %v1418 = vadd.s32 %v279, 104
      %v1419 = vadd.s32 %v279, 112
      %v1420 = vadd.s32 %v279, 120
      %vm1421 = vcmp.lt.s32.totalorder %v279, 16
      %vm1422 = vcmp.lt.s32.totalorder %v280, 16
      %vm1423 = vcmp.lt.s32.totalorder %v281, 16
      %vm1424 = vcmp.lt.s32.totalorder %v1408, 16
      %vm1425 = vcmp.lt.s32.totalorder %v1409, 16
      %vm1426 = vcmp.lt.s32.totalorder %v1410, 16
      %vm1427 = vcmp.lt.s32.totalorder %v1411, 16
      %vm1428 = vcmp.lt.s32.totalorder %v1412, 16
      %vm1429 = vcmp.lt.s32.totalorder %v1413, 16
      %vm1430 = vcmp.lt.s32.totalorder %v1414, 16
      %vm1431 = vcmp.lt.s32.totalorder %v1415, 16
      %vm1432 = vcmp.lt.s32.totalorder %v1416, 16
      %vm1433 = vcmp.lt.s32.totalorder %v1417, 16
      %vm1434 = vcmp.lt.s32.totalorder %v1418, 16
      %vm1435 = vcmp.lt.s32.totalorder %v1419, 16
      %vm1436 = vcmp.lt.s32.totalorder %v1420, 16
      %v1437 = vsel %vm1421, %v1392, %v1080
      %v1438 = vsel %vm1422, %v1393, %v1081
      %v1439 = vsel %vm1423, %v1394, %v1082
      %v1440 = vsel %vm1424, %v1395, %v1083
      %v1441 = vsel %vm1425, %v1396, %v1084
      %v1442 = vsel %vm1426, %v1397, %v1085
      %v1443 = vsel %vm1427, %v1398, %v1086
      %v1444 = vsel %vm1428, %v1399, %v1087
      %v1445 = vsel %vm1429, %v1400, %v1088
      %v1446 = vsel %vm1430, %v1401, %v1089
      %v1447 = vsel %vm1431, %v1402, %v1090
      %v1448 = vsel %vm1432, %v1403, %v1091
      %v1449 = vsel %vm1433, %v1404, %v1092
      %v1450 = vsel %vm1434, %v1405, %v1093
      %v1451 = vsel %vm1435, %v1406, %v1094
      %v1452 = vsel %vm1436, %v1407, %v1095
      %v1453 = vmul.f32 %v768, 0.06666667
      %v1454 = vmul.f32 %v769, 0.06666667
      %v1455 = vmul.f32 %v770, 0.06666667
      %v1456 = vmul.f32 %v771, 0.06666667
      %v1457 = vmul.f32 %v772, 0.06666667
      %v1458 = vmul.f32 %v773, 0.06666667
      %v1459 = vmul.f32 %v774, 0.06666667
      %v1460 = vmul.f32 %v775, 0.06666667
      %v1461 = vmul.f32 %v776, 0.06666667
      %v1462 = vmul.f32 %v777, 0.06666667
      %v1463 = vmul.f32 %v778, 0.06666667
      %v1464 = vmul.f32 %v779, 0.06666667
      %v1465 = vmul.f32 %v780, 0.06666667
      %v1466 = vmul.f32 %v781, 0.06666667
      %v1467 = vmul.f32 %v782, 0.06666667
      %v1468 = vmul.f32 %v783, 0.06666667
      %v1469 = vadd.f32 %v1453, %v1437
      %v1470 = vadd.f32 %v1454, %v1438
      %v1471 = vadd.f32 %v1455, %v1439
      %v1472 = vadd.f32 %v1456, %v1440
      %v1473 = vadd.f32 %v1457, %v1441
      %v1474 = vadd.f32 %v1458, %v1442
      %v1475 = vadd.f32 %v1459, %v1443
      %v1476 = vadd.f32 %v1460, %v1444
      %v1477 = vadd.f32 %v1461, %v1445
      %v1478 = vadd.f32 %v1462, %v1446
      %v1479 = vadd.f32 %v1463, %v1447
      %v1480 = vadd.f32 %v1464, %v1448
      %v1481 = vadd.f32 %v1465, %v1449
      %v1482 = vadd.f32 %v1466, %v1450
      %v1483 = vadd.f32 %v1467, %v1451
      %v1484 = vadd.f32 %v1468, %v1452
      %v1485 = vmul.f32 %v1469, 0.5
      %v1486 = vmul.f32 %v1470, 0.5
      %v1487 = vmul.f32 %v1471, 0.5
      %v1488 = vmul.f32 %v1472, 0.5
      %v1489 = vmul.f32 %v1473, 0.5
      %v1490 = vmul.f32 %v1474, 0.5
      %v1491 = vmul.f32 %v1475, 0.5
      %v1492 = vmul.f32 %v1476, 0.5
      %v1493 = vmul.f32 %v1477, 0.5
      %v1494 = vmul.f32 %v1478, 0.5
      %v1495 = vmul.f32 %v1479, 0.5
      %v1496 = vmul.f32 %v1480, 0.5
      %v1497 = vmul.f32 %v1481, 0.5
      %v1498 = vmul.f32 %v1482, 0.5
      %v1499 = vmul.f32 %v1483, 0.5
      %v1500 = vmul.f32 %v1484, 0.5
      %v1501 = vpack.c.bf16 %v1486, %v1485
      %v1502 = vpack.c.bf16 %v1488, %v1487
      %v1503 = vpack.c.bf16 %v1490, %v1489
      %v1504 = vpack.c.bf16 %v1492, %v1491
      %v1505 = vpack.c.bf16 %v1494, %v1493
      %v1506 = vpack.c.bf16 %v1496, %v1495
      %v1507 = vpack.c.bf16 %v1498, %v1497
      %v1508 = vpack.c.bf16 %v1500, %v1499
      %v1509 = vld [vmem:[%s1] sm:$0x3]
      %v1510 = vld [vmem:[%s2] sm:$0x1]
      %v1512 = vperm.slane %v1510, 0
      %vm1514 = vcmask 31744
      %v1516 = vsel %vm1514, %v1501, 0
      %v1519 = vsel %vm1514, %v1502, 0
      %v1522 = vsel %vm1514, %v1503, 0
      %v1525 = vsel %vm1514, %v1504, 0
      %v1528 = vsel %vm1514, %v1505, 0
      %v1531 = vsel %vm1514, %v1506, 0
      %v1534 = vsel %vm1514, %v1507, 0
      %v1537 = vsel %vm1514, %v1508, 0
      %vm1539 = vcmask 1041408
      %v1541 = vsel %vm1539, %v1509, 0
      %1543 = vmatpush.bf16.msra.mxu0 0
      %1544 = vmatpush.bf16.msra.mxu0 0
      %1545 = vmatpush.bf16.msra.mxu0 0
      %1546 = vmatpush.bf16.msra.mxu0 0
      %1547 = vmatpush.bf16.msra.mxu0 0
      %1548 = vmatpush.bf16.msra.mxu0 0
      %1549 = vmatpush.bf16.msra.mxu0 0
      %1550 = vmatpush.bf16.msra.mxu0 %v1541
      %1551 = vmatmul.bf16.gmra.mxu0 %v1516
      %v1552 = vpop.f32.mrf.mxu0
      %v1553 = vadd.f32 %v1512, %v1552
      %v1554 = vpop.f32.mrf.mxu0
      %v1555 = vadd.f32 %v1512, %v1554
      %1556 = vmatmul.bf16.gmra.mxu0 %v1519
      %v1557 = vpop.f32.mrf.mxu0
      %v1558 = vadd.f32 %v1512, %v1557
      %v1559 = vpop.f32.mrf.mxu0
      %v1560 = vadd.f32 %v1512, %v1559
      %1561 = vmatmul.bf16.gmra.mxu0 %v1522
      %v1562 = vpop.f32.mrf.mxu0
      %v1563 = vadd.f32 %v1512, %v1562
      %v1564 = vpop.f32.mrf.mxu0
      %v1565 = vadd.f32 %v1512, %v1564
      %1566 = vmatmul.bf16.gmra.mxu0 %v1525
      %v1567 = vpop.f32.mrf.mxu0
      %v1568 = vadd.f32 %v1512, %v1567
      %v1569 = vpop.f32.mrf.mxu0
      %v1570 = vadd.f32 %v1512, %v1569
      %1571 = vmatmul.bf16.gmra.mxu0 %v1528
      %v1572 = vpop.f32.mrf.mxu0
      %v1573 = vadd.f32 %v1512, %v1572
      %v1574 = vpop.f32.mrf.mxu0
      %v1575 = vadd.f32 %v1512, %v1574
      %1576 = vmatmul.bf16.gmra.mxu0 %v1531
      %v1577 = vpop.f32.mrf.mxu0
      %v1578 = vadd.f32 %v1512, %v1577
      %v1579 = vpop.f32.mrf.mxu0
      %v1580 = vadd.f32 %v1512, %v1579
      %1581 = vmatmul.bf16.gmra.mxu0 %v1534
      %v1582 = vpop.f32.mrf.mxu0
      %v1583 = vadd.f32 %v1512, %v1582
      %v1584 = vpop.f32.mrf.mxu0
      %v1585 = vadd.f32 %v1512, %v1584
      %1586 = vmatmul.bf16.gmra.mxu0 %v1537
      %v1587 = vpop.f32.mrf.mxu0
      %v1588 = vadd.f32 %v1512, %v1587
      %v1589 = vpop.f32.mrf.mxu0
      %v1590 = vadd.f32 %v1512, %v1589
      %1591 = vdwg.mxu0
      %vm1592 = vcmask 64512
      %v1593 = vsel %vm1592, %v1553, 0.0
      %1594 = vadd.xlane.f32.xlu0 %v1593
      %v1595 = vpop.xlane.xlu0 %1594
      %v1596 = vsel %vm1592, %v1555, 0.0
      %1597 = vadd.xlane.f32.xlu0 %v1596
      %v1598 = vpop.xlane.xlu0 %1597
      %v1599 = vsel %vm1592, %v1558, 0.0
      %1600 = vadd.xlane.f32.xlu0 %v1599
      %v1601 = vpop.xlane.xlu0 %1600
      %v1602 = vsel %vm1592, %v1560, 0.0
      %1603 = vadd.xlane.f32.xlu0 %v1602
      %v1604 = vpop.xlane.xlu0 %1603
      %v1605 = vsel %vm1592, %v1563, 0.0
      %1606 = vadd.xlane.f32.xlu0 %v1605
      %v1607 = vpop.xlane.xlu0 %1606
      %v1608 = vsel %vm1592, %v1565, 0.0
      %1609 = vadd.xlane.f32.xlu0 %v1608
      %v1610 = vpop.xlane.xlu0 %1609
      %v1611 = vsel %vm1592, %v1568, 0.0
      %1612 = vadd.xlane.f32.xlu0 %v1611
      %v1613 = vpop.xlane.xlu0 %1612
      %v1614 = vsel %vm1592, %v1570, 0.0
      %1615 = vadd.xlane.f32.xlu0 %v1614
      %v1616 = vpop.xlane.xlu0 %1615
      %v1617 = vsel %vm1592, %v1573, 0.0
      %1618 = vadd.xlane.f32.xlu0 %v1617
      %v1619 = vpop.xlane.xlu0 %1618
      %v1620 = vsel %vm1592, %v1575, 0.0
      %1621 = vadd.xlane.f32.xlu0 %v1620
      %v1622 = vpop.xlane.xlu0 %1621
      %v1623 = vsel %vm1592, %v1578, 0.0
      %1624 = vadd.xlane.f32.xlu0 %v1623
      %v1625 = vpop.xlane.xlu0 %1624
      %v1626 = vsel %vm1592, %v1580, 0.0
      %1627 = vadd.xlane.f32.xlu0 %v1626
      %v1628 = vpop.xlane.xlu0 %1627
      %v1629 = vsel %vm1592, %v1583, 0.0
      %1630 = vadd.xlane.f32.xlu0 %v1629
      %v1631 = vpop.xlane.xlu0 %1630
      %v1632 = vsel %vm1592, %v1585, 0.0
      %1633 = vadd.xlane.f32.xlu0 %v1632
      %v1634 = vpop.xlane.xlu0 %1633
      %v1635 = vsel %vm1592, %v1588, 0.0
      %1636 = vadd.xlane.f32.xlu0 %v1635
      %v1637 = vpop.xlane.xlu0 %1636
      %v1638 = vsel %vm1592, %v1590, 0.0
      %1639 = vadd.xlane.f32.xlu0 %v1638
      %v1640 = vpop.xlane.xlu0 %1639
      %v1641 = vrcp.pop 8.0
      %v1642 = vmul.f32 8.0, %v1641
      %v1643 = vsub.f32 1.0, %v1642
      %v1644 = vmul.f32 %v1641, %v1643
      %v1645 = vadd.f32 %v1641, %v1644
      %vm1646 = vweird.f32 %v1641
      %v1647 = vsel %vm1646, %v1641, %v1645
      %v1648 = vmul.f32 %v1595, %v1647
      %v1649 = vmul.f32 %v1598, %v1647
      %v1650 = vmul.f32 %v1601, %v1647
      %v1651 = vmul.f32 %v1604, %v1647
      %v1652 = vmul.f32 %v1607, %v1647
      %v1653 = vmul.f32 %v1610, %v1647
      %v1654 = vmul.f32 %v1613, %v1647
      %v1655 = vmul.f32 %v1616, %v1647
      %v1656 = vmul.f32 %v1619, %v1647
      %v1657 = vmul.f32 %v1622, %v1647
      %v1658 = vmul.f32 %v1625, %v1647
      %v1659 = vmul.f32 %v1628, %v1647
      %v1660 = vmul.f32 %v1631, %v1647
      %v1661 = vmul.f32 %v1634, %v1647
      %v1662 = vmul.f32 %v1637, %v1647
      %v1663 = vmul.f32 %v1640, %v1647
      %v1664 = vsub.f32 %v1553, %v1648
      %v1665 = vsub.f32 %v1555, %v1649
      %v1666 = vsub.f32 %v1558, %v1650
      %v1667 = vsub.f32 %v1560, %v1651
      %v1668 = vsub.f32 %v1563, %v1652
      %v1669 = vsub.f32 %v1565, %v1653
      %v1670 = vsub.f32 %v1568, %v1654
      %v1671 = vsub.f32 %v1570, %v1655
      %v1672 = vsub.f32 %v1573, %v1656
      %v1673 = vsub.f32 %v1575, %v1657
      %v1674 = vsub.f32 %v1578, %v1658
      %v1675 = vsub.f32 %v1580, %v1659
      %v1676 = vsub.f32 %v1583, %v1660
      %v1677 = vsub.f32 %v1585, %v1661
      %v1678 = vsub.f32 %v1588, %v1662
      %v1679 = vsub.f32 %v1590, %v1663
      %v1680 = vmul.f32 %v1664, %v1664
      %v1681 = vmul.f32 %v1665, %v1665
      %v1682 = vmul.f32 %v1666, %v1666
      %v1683 = vmul.f32 %v1667, %v1667
      %v1684 = vmul.f32 %v1668, %v1668
      %v1685 = vmul.f32 %v1669, %v1669
      %v1686 = vmul.f32 %v1670, %v1670
      %v1687 = vmul.f32 %v1671, %v1671
      %v1688 = vmul.f32 %v1672, %v1672
      %v1689 = vmul.f32 %v1673, %v1673
      %v1690 = vmul.f32 %v1674, %v1674
      %v1691 = vmul.f32 %v1675, %v1675
      %v1692 = vmul.f32 %v1676, %v1676
      %v1693 = vmul.f32 %v1677, %v1677
      %v1694 = vmul.f32 %v1678, %v1678
      %v1695 = vmul.f32 %v1679, %v1679
      %v1696 = vsel %vm1592, %v1680, 0.0
      %1697 = vadd.xlane.f32.xlu0 %v1696
      %v1698 = vpop.xlane.xlu0 %1697
      %v1699 = vsel %vm1592, %v1681, 0.0
      %1700 = vadd.xlane.f32.xlu0 %v1699
      %v1701 = vpop.xlane.xlu0 %1700
      %v1702 = vsel %vm1592, %v1682, 0.0
      %1703 = vadd.xlane.f32.xlu0 %v1702
      %v1704 = vpop.xlane.xlu0 %1703
      %v1705 = vsel %vm1592, %v1683, 0.0
      %1706 = vadd.xlane.f32.xlu0 %v1705
      %v1707 = vpop.xlane.xlu0 %1706
      %v1708 = vsel %vm1592, %v1684, 0.0
      %1709 = vadd.xlane.f32.xlu0 %v1708
      %v1710 = vpop.xlane.xlu0 %1709
      %v1711 = vsel %vm1592, %v1685, 0.0
      %1712 = vadd.xlane.f32.xlu0 %v1711
      %v1713 = vpop.xlane.xlu0 %1712
      %v1714 = vsel %vm1592, %v1686, 0.0
      %1715 = vadd.xlane.f32.xlu0 %v1714
      %v1716 = vpop.xlane.xlu0 %1715
      %v1717 = vsel %vm1592, %v1687, 0.0
      %1718 = vadd.xlane.f32.xlu0 %v1717
      %v1719 = vpop.xlane.xlu0 %1718
      %v1720 = vsel %vm1592, %v1688, 0.0
      %1721 = vadd.xlane.f32.xlu0 %v1720
      %v1722 = vpop.xlane.xlu0 %1721
      %v1723 = vsel %vm1592, %v1689, 0.0
      %1724 = vadd.xlane.f32.xlu0 %v1723
      %v1725 = vpop.xlane.xlu0 %1724
      %v1726 = vsel %vm1592, %v1690, 0.0
      %1727 = vadd.xlane.f32.xlu0 %v1726
      %v1728 = vpop.xlane.xlu0 %1727
      %v1729 = vsel %vm1592, %v1691, 0.0
      %1730 = vadd.xlane.f32.xlu0 %v1729
      %v1731 = vpop.xlane.xlu0 %1730
      %v1732 = vsel %vm1592, %v1692, 0.0
      %1733 = vadd.xlane.f32.xlu0 %v1732
      %v1734 = vpop.xlane.xlu0 %1733
      %v1735 = vsel %vm1592, %v1693, 0.0
      %1736 = vadd.xlane.f32.xlu0 %v1735
      %v1737 = vpop.xlane.xlu0 %1736
      %v1738 = vsel %vm1592, %v1694, 0.0
      %1739 = vadd.xlane.f32.xlu0 %v1738
      %v1740 = vpop.xlane.xlu0 %1739
      %v1741 = vsel %vm1592, %v1695, 0.0
      %1742 = vadd.xlane.f32.xlu0 %v1741
      %v1743 = vpop.xlane.xlu0 %1742
      %v1744 = vmul.f32 %v1698, %v1647
      %v1745 = vmul.f32 %v1701, %v1647
      %v1746 = vmul.f32 %v1704, %v1647
      %v1747 = vmul.f32 %v1707, %v1647
      %v1748 = vmul.f32 %v1710, %v1647
      %v1749 = vmul.f32 %v1713, %v1647
      %v1750 = vmul.f32 %v1716, %v1647
      %v1751 = vmul.f32 %v1719, %v1647
      %v1752 = vmul.f32 %v1722, %v1647
      %v1753 = vmul.f32 %v1725, %v1647
      %v1754 = vmul.f32 %v1728, %v1647
      %v1755 = vmul.f32 %v1731, %v1647
      %v1756 = vmul.f32 %v1734, %v1647
      %v1757 = vmul.f32 %v1737, %v1647
      %v1758 = vmul.f32 %v1740, %v1647
      %v1759 = vmul.f32 %v1743, %v1647
      %v1760 = vadd.f32 %v1744, 1e-05
      %v1761 = vadd.f32 %v1745, 1e-05
      %v1762 = vadd.f32 %v1746, 1e-05
      %v1763 = vadd.f32 %v1747, 1e-05
      %v1764 = vadd.f32 %v1748, 1e-05
      %v1765 = vadd.f32 %v1749, 1e-05
      %v1766 = vadd.f32 %v1750, 1e-05
      %v1767 = vadd.f32 %v1751, 1e-05
      %v1768 = vadd.f32 %v1752, 1e-05
      %v1769 = vadd.f32 %v1753, 1e-05
      %v1770 = vadd.f32 %v1754, 1e-05
      %v1771 = vadd.f32 %v1755, 1e-05
      %v1772 = vadd.f32 %v1756, 1e-05
      %v1773 = vadd.f32 %v1757, 1e-05
      %v1774 = vadd.f32 %v1758, 1e-05
      %v1775 = vadd.f32 %v1759, 1e-05
      %v1776 = vrsqrt.pop %v1760
      %v1777 = vmul.f32 %v1776, %v1760
      %v1778 = vmul.f32 %v1777, %v1776
      %v1779 = vmul.f32 0.5, %v1778
      %v1780 = vsub.f32 1.5, %v1779
      %v1781 = vmul.f32 %v1776, %v1780
      %vm1782 = vweird.f32 %v1760
      %vm1783 = vweird.f32 %v1776
      %vm1784 = vmor %vm1782, %vm1783
      %v1785 = vsel %vm1784, %v1776, %v1781
      %v1786 = vrsqrt.pop %v1761
      %v1787 = vmul.f32 %v1786, %v1761
      %v1788 = vmul.f32 %v1787, %v1786
      %v1789 = vmul.f32 0.5, %v1788
      %v1790 = vsub.f32 1.5, %v1789
      %v1791 = vmul.f32 %v1786, %v1790
      %vm1792 = vweird.f32 %v1761
      %vm1793 = vweird.f32 %v1786
      %vm1794 = vmor %vm1792, %vm1793
      %v1795 = vsel %vm1794, %v1786, %v1791
      %v1796 = vrsqrt.pop %v1762
      %v1797 = vmul.f32 %v1796, %v1762
      %v1798 = vmul.f32 %v1797, %v1796
      %v1799 = vmul.f32 0.5, %v1798
      %v1800 = vsub.f32 1.5, %v1799
      %v1801 = vmul.f32 %v1796, %v1800
      %vm1802 = vweird.f32 %v1762
      %vm1803 = vweird.f32 %v1796
      %vm1804 = vmor %vm1802, %vm1803
      %v1805 = vsel %vm1804, %v1796, %v1801
      %v1806 = vrsqrt.pop %v1763
      %v1807 = vmul.f32 %v1806, %v1763
      %v1808 = vmul.f32 %v1807, %v1806
      %v1809 = vmul.f32 0.5, %v1808
      %v1810 = vsub.f32 1.5, %v1809
      %v1811 = vmul.f32 %v1806, %v1810
      %vm1812 = vweird.f32 %v1763
      %vm1813 = vweird.f32 %v1806
      %vm1814 = vmor %vm1812, %vm1813
      %v1815 = vsel %vm1814, %v1806, %v1811
      %v1816 = vrsqrt.pop %v1764
      %v1817 = vmul.f32 %v1816, %v1764
      %v1818 = vmul.f32 %v1817, %v1816
      %v1819 = vmul.f32 0.5, %v1818
      %v1820 = vsub.f32 1.5, %v1819
      %v1821 = vmul.f32 %v1816, %v1820
      %vm1822 = vweird.f32 %v1764
      %vm1823 = vweird.f32 %v1816
      %vm1824 = vmor %vm1822, %vm1823
      %v1825 = vsel %vm1824, %v1816, %v1821
      %v1826 = vrsqrt.pop %v1765
      %v1827 = vmul.f32 %v1826, %v1765
      %v1828 = vmul.f32 %v1827, %v1826
      %v1829 = vmul.f32 0.5, %v1828
      %v1830 = vsub.f32 1.5, %v1829
      %v1831 = vmul.f32 %v1826, %v1830
      %vm1832 = vweird.f32 %v1765
      %vm1833 = vweird.f32 %v1826
      %vm1834 = vmor %vm1832, %vm1833
      %v1835 = vsel %vm1834, %v1826, %v1831
      %v1836 = vrsqrt.pop %v1766
      %v1837 = vmul.f32 %v1836, %v1766
      %v1838 = vmul.f32 %v1837, %v1836
      %v1839 = vmul.f32 0.5, %v1838
      %v1840 = vsub.f32 1.5, %v1839
      %v1841 = vmul.f32 %v1836, %v1840
      %vm1842 = vweird.f32 %v1766
      %vm1843 = vweird.f32 %v1836
      %vm1844 = vmor %vm1842, %vm1843
      %v1845 = vsel %vm1844, %v1836, %v1841
      %v1846 = vrsqrt.pop %v1767
      %v1847 = vmul.f32 %v1846, %v1767
      %v1848 = vmul.f32 %v1847, %v1846
      %v1849 = vmul.f32 0.5, %v1848
      %v1850 = vsub.f32 1.5, %v1849
      %v1851 = vmul.f32 %v1846, %v1850
      %vm1852 = vweird.f32 %v1767
      %vm1853 = vweird.f32 %v1846
      %vm1854 = vmor %vm1852, %vm1853
      %v1855 = vsel %vm1854, %v1846, %v1851
      %v1856 = vrsqrt.pop %v1768
      %v1857 = vmul.f32 %v1856, %v1768
      %v1858 = vmul.f32 %v1857, %v1856
      %v1859 = vmul.f32 0.5, %v1858
      %v1860 = vsub.f32 1.5, %v1859
      %v1861 = vmul.f32 %v1856, %v1860
      %vm1862 = vweird.f32 %v1768
      %vm1863 = vweird.f32 %v1856
      %vm1864 = vmor %vm1862, %vm1863
      %v1865 = vsel %vm1864, %v1856, %v1861
      %v1866 = vrsqrt.pop %v1769
      %v1867 = vmul.f32 %v1866, %v1769
      %v1868 = vmul.f32 %v1867, %v1866
      %v1869 = vmul.f32 0.5, %v1868
      %v1870 = vsub.f32 1.5, %v1869
      %v1871 = vmul.f32 %v1866, %v1870
      %vm1872 = vweird.f32 %v1769
      %vm1873 = vweird.f32 %v1866
      %vm1874 = vmor %vm1872, %vm1873
      %v1875 = vsel %vm1874, %v1866, %v1871
      %v1876 = vrsqrt.pop %v1770
      %v1877 = vmul.f32 %v1876, %v1770
      %v1878 = vmul.f32 %v1877, %v1876
      %v1879 = vmul.f32 0.5, %v1878
      %v1880 = vsub.f32 1.5, %v1879
      %v1881 = vmul.f32 %v1876, %v1880
      %vm1882 = vweird.f32 %v1770
      %vm1883 = vweird.f32 %v1876
      %vm1884 = vmor %vm1882, %vm1883
      %v1885 = vsel %vm1884, %v1876, %v1881
      %v1886 = vrsqrt.pop %v1771
      %v1887 = vmul.f32 %v1886, %v1771
      %v1888 = vmul.f32 %v1887, %v1886
      %v1889 = vmul.f32 0.5, %v1888
      %v1890 = vsub.f32 1.5, %v1889
      %v1891 = vmul.f32 %v1886, %v1890
      %vm1892 = vweird.f32 %v1771
      %vm1893 = vweird.f32 %v1886
      %vm1894 = vmor %vm1892, %vm1893
      %v1895 = vsel %vm1894, %v1886, %v1891
      %v1896 = vrsqrt.pop %v1772
      %v1897 = vmul.f32 %v1896, %v1772
      %v1898 = vmul.f32 %v1897, %v1896
      %v1899 = vmul.f32 0.5, %v1898
      %v1900 = vsub.f32 1.5, %v1899
      %v1901 = vmul.f32 %v1896, %v1900
      %vm1902 = vweird.f32 %v1772
      %vm1903 = vweird.f32 %v1896
      %vm1904 = vmor %vm1902, %vm1903
      %v1905 = vsel %vm1904, %v1896, %v1901
      %v1906 = vrsqrt.pop %v1773
      %v1907 = vmul.f32 %v1906, %v1773
      %v1908 = vmul.f32 %v1907, %v1906
      %v1909 = vmul.f32 0.5, %v1908
      %v1910 = vsub.f32 1.5, %v1909
      %v1911 = vmul.f32 %v1906, %v1910
      %vm1912 = vweird.f32 %v1773
      %vm1913 = vweird.f32 %v1906
      %vm1914 = vmor %vm1912, %vm1913
      %v1915 = vsel %vm1914, %v1906, %v1911
      %v1916 = vrsqrt.pop %v1774
      %v1917 = vmul.f32 %v1916, %v1774
      %v1918 = vmul.f32 %v1917, %v1916
      %v1919 = vmul.f32 0.5, %v1918
      %v1920 = vsub.f32 1.5, %v1919
      %v1921 = vmul.f32 %v1916, %v1920
      %vm1922 = vweird.f32 %v1774
      %vm1923 = vweird.f32 %v1916
      %vm1924 = vmor %vm1922, %vm1923
      %v1925 = vsel %vm1924, %v1916, %v1921
      %v1926 = vrsqrt.pop %v1775
      %v1927 = vmul.f32 %v1926, %v1775
      %v1928 = vmul.f32 %v1927, %v1926
      %v1929 = vmul.f32 0.5, %v1928
      %v1930 = vsub.f32 1.5, %v1929
      %v1931 = vmul.f32 %v1926, %v1930
      %vm1932 = vweird.f32 %v1775
      %vm1933 = vweird.f32 %v1926
      %vm1934 = vmor %vm1932, %vm1933
      %v1935 = vsel %vm1934, %v1926, %v1931
      %v1936 = vmul.f32 %v1664, %v1785
      %v1937 = vmul.f32 %v1665, %v1795
      %v1938 = vmul.f32 %v1666, %v1805
      %v1939 = vmul.f32 %v1667, %v1815
      %v1940 = vmul.f32 %v1668, %v1825
      %v1941 = vmul.f32 %v1669, %v1835
      %v1942 = vmul.f32 %v1670, %v1845
      %v1943 = vmul.f32 %v1671, %v1855
      %v1944 = vmul.f32 %v1672, %v1865
      %v1945 = vmul.f32 %v1673, %v1875
      %v1946 = vmul.f32 %v1674, %v1885
      %v1947 = vmul.f32 %v1675, %v1895
      %v1948 = vmul.f32 %v1676, %v1905
      %v1949 = vmul.f32 %v1677, %v1915
      %v1950 = vmul.f32 %v1678, %v1925
      %v1951 = vmul.f32 %v1679, %v1935
      %v1952 = vld [vmem:[%s3] sm:$0x1]
      %v1954 = vperm.slane %v1952, 0
      %v1956 = vmul.f32 %v1936, %v1954
      %v1957 = vmul.f32 %v1937, %v1954
      %v1958 = vmul.f32 %v1938, %v1954
      %v1959 = vmul.f32 %v1939, %v1954
      %v1960 = vmul.f32 %v1940, %v1954
      %v1961 = vmul.f32 %v1941, %v1954
      %v1962 = vmul.f32 %v1942, %v1954
      %v1963 = vmul.f32 %v1943, %v1954
      %v1964 = vmul.f32 %v1944, %v1954
      %v1965 = vmul.f32 %v1945, %v1954
      %v1966 = vmul.f32 %v1946, %v1954
      %v1967 = vmul.f32 %v1947, %v1954
      %v1968 = vmul.f32 %v1948, %v1954
      %v1969 = vmul.f32 %v1949, %v1954
      %v1970 = vmul.f32 %v1950, %v1954
      %v1971 = vmul.f32 %v1951, %v1954
      %v1972 = vld [vmem:[%s4] sm:$0x1]
      %v1974 = vperm.slane %v1972, 0
      %v1976 = vadd.f32 %v1956, %v1974
      %v1977 = vadd.f32 %v1957, %v1974
      %v1978 = vadd.f32 %v1958, %v1974
      %v1979 = vadd.f32 %v1959, %v1974
      %v1980 = vadd.f32 %v1960, %v1974
      %v1981 = vadd.f32 %v1961, %v1974
      %v1982 = vadd.f32 %v1962, %v1974
      %v1983 = vadd.f32 %v1963, %v1974
      %v1984 = vadd.f32 %v1964, %v1974
      %v1985 = vadd.f32 %v1965, %v1974
      %v1986 = vadd.f32 %v1966, %v1974
      %v1987 = vadd.f32 %v1967, %v1974
      %v1988 = vadd.f32 %v1968, %v1974
      %v1989 = vadd.f32 %v1969, %v1974
      %v1990 = vadd.f32 %v1970, %v1974
      %v1991 = vadd.f32 %v1971, %v1974
      %1992 = vst.msk [vmem:[%s224] sm:$0xff] %vm1592, %v1976
      %1993 = vst.msk [vmem:[%s224 + $0x8] sm:$0xff] %vm1592, %v1977
      %1994 = vst.msk [vmem:[%s224 + $0x10] sm:$0xff] %vm1592, %v1978
      %1995 = vst.msk [vmem:[%s224 + $0x18] sm:$0xff] %vm1592, %v1979
      %1996 = vst.msk [vmem:[%s224 + $0x20] sm:$0xff] %vm1592, %v1980
      %1997 = vst.msk [vmem:[%s224 + $0x28] sm:$0xff] %vm1592, %v1981
      %1998 = vst.msk [vmem:[%s224 + $0x30] sm:$0xff] %vm1592, %v1982
      %1999 = vst.msk [vmem:[%s224 + $0x38] sm:$0xff] %vm1592, %v1983
      %2000 = vst.msk [vmem:[%s224 + $0x40] sm:$0xff] %vm1592, %v1984
      %2001 = vst.msk [vmem:[%s224 + $0x48] sm:$0xff] %vm1592, %v1985
      %2002 = vst.msk [vmem:[%s224 + $0x50] sm:$0xff] %vm1592, %v1986
      %2003 = vst.msk [vmem:[%s224 + $0x58] sm:$0xff] %vm1592, %v1987
      %2004 = vst.msk [vmem:[%s224 + $0x60] sm:$0xff] %vm1592, %v1988
      %2005 = vst.msk [vmem:[%s224 + $0x68] sm:$0xff] %vm1592, %v1989
      %2006 = vst.msk [vmem:[%s224 + $0x70] sm:$0xff] %vm1592, %v1990
      %2007 = vst.msk [vmem:[%s224 + $0x78] sm:$0xff] %vm1592, %v1991
      %s2008 = smul.u32 16, %s16
      %p2009 = scmp.lt.s32.totalorder %s2008, 31
      %s2010 = scalar_select %p2009, %s2008, 31
      %s2011 = smul.addr %s2010, 8
      %s2012 = scalar_lea.vmem %s5, %s2011
      // Predicated region
      $region41: #{merging_block_forward.1} parent=39 // pred_check
        %p2013 = pneg %p144
      $region42: #{merging_block_forward.1} parent=39 // pred_check_branch
        %2015 = sbr.rel (%p2013) target = $region44
      $region43: #{merging_block_forward.1} parent=39 // pred_region
        %s2016 = smul.u32 16, %s16
      $region44: #{merging_block_forward.1} parent=39 // pred_fallthru
        _
    $region40: #{merging_block_forward.1} parent=5 // pred_fallthru
      _
    %p2017 = scmp.le.s32.totalorder 2, %s11
    // Predicated region
    $region45: #{merging_block_forward.1} parent=5 // pred_check
      %p2018 = pneg %p2017
    $region46: #{merging_block_forward.1} parent=5 // pred_check_branch
      %2020 = sbr.rel (%p2018) target = $region48
    $region47: #{merging_block_forward.1} parent=5 // pred_region
      %s2021 = ssub.s32 %s11, 2
      // Predicated region
      $region49: #{merging_block_forward.1} parent=47 // pred_check
        %p2022 = pneg %p150
      $region50: #{merging_block_forward.1} parent=47 // pred_check_branch
        %2024 = sbr.rel (%p2022) target = $region52
      $region51: #{merging_block_forward.1} parent=47 // pred_region
        %s2025 = smul.u32 16, %s17
        %p2026 = scmp.lt.s32.totalorder %s2025, 31
        %s2027 = scalar_select %p2026, %s2025, 31
        %s2028 = smul.addr %s2027, 8
        %s2029 = scalar_lea.vmem %s5, %s2028
      $region52: #{merging_block_forward.1} parent=47 // pred_fallthru
        _
    $region48: #{merging_block_forward.1} parent=5 // pred_fallthru
      _
  $region6: #{merging_block_forward.1} parent=0 // loop_footer
    %s15 = sadd.s32 1, %s11
  $region7: #{merging_block_forward.1} parent=0 // loop_footer_branch
    %10 = sbr.rel target = $region3
  $region8: #{merging_block_forward.1} parent=0 // loop_exit
    _

</llo_original>
